<compile_context>
chip_gen: v7x
topology: tpu7x:2x2x1
jax: 0.10.0
libtpu: 0.0.40
codegen_flags: <defaults>
</compile_context>

<pallas_src>
import jax
import jax.numpy as jnp
from jax.experimental import pallas as pl
from jax.experimental.pallas import tpu as pltpu

_EPS_BN = 1e-5


# ------------------------------ Pallas kernel -------------------------------

def _gaf_kernel(x_ref, r_ref,
                w1l_ref, w2l_ref, w1g_ref, w2g_ref, w1l2_ref, w2l2_ref,
                b1_ref, b2_ref,
                o_ref):
    """One batch element per grid step.

    x_ref/r_ref/o_ref : (1, C, HW) bf16
    w1*_ref           : (Ci, C) bf16  (first 1x1 conv, BN scale pre-folded)
    w2*_ref           : (C, Ci) bf16  (second 1x1 conv, BN scale pre-folded)
    b1_ref            : (Ci, 3) f32   folded (conv-bias + BN) bias, layer 1
    b2_ref            : (C, 3)  f32   folded bias, layer 2
    branch index k: 0 = local_att, 1 = global_att, 2 = local_att2
    """
    x = x_ref[0].astype(jnp.float32)       # (C, HW)
    rs = r_ref[0].astype(jnp.float32)
    d = x - rs                              # shared by both blends

    def branch(v_bf16, w1_ref, w2_ref, k):
        # conv1x1 -> BN -> ReLU -> conv1x1 -> BN (BN scales folded in weights)
        h = jnp.dot(w1_ref[...], v_bf16, preferred_element_type=jnp.float32)
        h = jnp.maximum(h + b1_ref[:, k:k + 1], 0.0)
        o = jnp.dot(w2_ref[...], h.astype(jnp.bfloat16),
                    preferred_element_type=jnp.float32)
        return o + b2_ref[:, k:k + 1]

    # ---- stage 1 ----
    xa = x + rs                                            # (C, HW) f32
    xm = jnp.mean(xa, axis=-1, keepdims=True)              # (C, 1) global pool
    xl = branch(xa.astype(jnp.bfloat16), w1l_ref, w2l_ref, 0)        # (C, HW)
    xg = branch(xm.astype(jnp.bfloat16), w1g_ref, w2g_ref, 1)        # (C, 1)
    wei = jax.nn.sigmoid(xl + xg)                          # f32 gate
    xi = rs + d * wei                                      # x*wei + rs*(1-wei)

    # ---- stage 2 ---- (PyTorch forward re-uses global_att, not global_att2)
    xm2 = jnp.mean(xi, axis=-1, keepdims=True)
    xl2 = branch(xi.astype(jnp.bfloat16), w1l2_ref, w2l2_ref, 2)
    xg2 = branch(xm2.astype(jnp.bfloat16), w1g_ref, w2g_ref, 1)
    wei2 = jax.nn.sigmoid(xl2 + xg2)
    o_ref[0] = (rs + d * wei2).astype(o_ref.dtype)


# ------------------------------ host wrapper --------------------------------

@jax.jit
def gaf_forward(x_nchw, res_nchw, params):
    n, c, h, w = x_nchw.shape
    hw = h * w
    # Free reshapes straight off the NCHW buffer; bf16 I/O across the kernel.
    x = x_nchw.reshape(n, c, hw).astype(jnp.bfloat16)
    r = res_nchw.reshape(n, c, hw).astype(jnp.bfloat16)

    branches = [params["local"], params["global"], params["local2"]]
    b1 = jnp.stack([b["b1"] for b in branches], axis=-1)   # (Ci, 3)
    b2 = jnp.stack([b["b2"] for b in branches], axis=-1)   # (C, 3)
    ci = b1.shape[0]

    feat_spec = pl.BlockSpec((1, c, hw), lambda b: (b, 0, 0))
    w1_spec = pl.BlockSpec((ci, c), lambda b: (0, 0))
    w2_spec = pl.BlockSpec((c, ci), lambda b: (0, 0))
    b1_spec = pl.BlockSpec((ci, 3), lambda b: (0, 0))
    b2_spec = pl.BlockSpec((c, 3), lambda b: (0, 0))

    out = pl.pallas_call(
        _gaf_kernel,
        out_shape=jax.ShapeDtypeStruct((n, c, hw), jnp.bfloat16),
        grid_spec=pltpu.PrefetchScalarGridSpec(
            num_scalar_prefetch=0,
            grid=(n,),
            in_specs=[feat_spec, feat_spec,
                      w1_spec, w2_spec,      # local_att
                      w1_spec, w2_spec,      # global_att
                      w1_spec, w2_spec,      # local_att2
                      b1_spec, b2_spec],
            out_specs=feat_spec,
        ),
        compiler_params=pltpu.CompilerParams(
            dimension_semantics=("parallel",)),
    )(x, r,
      params["local"]["w1"], params["local"]["w2"],
      params["global"]["w1"], params["global"]["w2"],
      params["local2"]["w1"], params["local2"]["w2"],
      b1, b2)

    return out.reshape(n, c, h, w)      # NCHW, bf16


# --------------------------- parameter construction -------------------------

class ParamGen:
    def __init__(self, seed=0):
        self._key = jax.random.PRNGKey(seed)
        self._i = 0

    def normal(self, shape, std=1.0):
        self._i += 1
        k = jax.random.fold_in(self._key, self._i)
        return std * jax.random.normal(k, shape, jnp.float32)


def _fold_bn(pg, conv_bias, c):
    gamma = 1.0 + 0.1 * pg.normal((c,))
    beta = 0.1 * pg.normal((c,))
    mean = 0.1 * pg.normal((c,))
    var = 1.0 + 0.1 * jnp.abs(pg.normal((c,)))
    scale = gamma / jnp.sqrt(var + _EPS_BN)          # eval-mode folded BN
    bias = beta + (conv_bias - mean) * scale         # conv bias folded in too
    return scale, bias


def make_branch(pg, c, ci):
    """Conv1x1(C->Ci,bias)+BN+ReLU, Conv1x1(Ci->C,bias)+BN.

    BN scales are folded into the conv weights in f32, then cast to bf16, so
    the kernel epilogue is only bias-add (+ReLU).  Weights are stored in the
    orientation used by the (C, HW) kernel layout: w1 (Ci, C), w2 (C, Ci).
    """
    w1 = pg.normal((ci, c), std=(2.0 / c) ** 0.5)
    b1_conv = 0.1 * pg.normal((ci,))
    s1, b1 = _fold_bn(pg, b1_conv, ci)
    w2 = pg.normal((c, ci), std=(2.0 / ci) ** 0.5)
    b2_conv = 0.1 * pg.normal((c,))
    s2, b2 = _fold_bn(pg, b2_conv, c)
    return {"w1": (w1 * s1[:, None]).astype(jnp.bfloat16),
            "w2": (w2 * s2[:, None]).astype(jnp.bfloat16),
            "b1": b1, "b2": b2}


# ---------------------------------- main -------------------------------------

if __name__ == "__main__":
    C, R = 64, 4          # GAF defaults
    CI = C // R
    pg = ParamGen(0)
    params = {
        "local": make_branch(pg, C, CI),
        "global": make_branch(pg, C, CI),
        "local2": make_branch(pg, C, CI),
        # global_att2 exists in the PyTorch module but is never used by
        # GAF.forward, so it carries no parameters here.
    }

    key = jax.random.PRNGKey(0)
    kx, kr = jax.random.split(key)
    N, H, W = 2, 16, 16
    x = jax.random.normal(kx, (N, C, H, W), jnp.float32)
    residual = jax.random.normal(kr, (N, C, H, W), jnp.float32)

    out = jax.block_until_ready(gaf_forward(x, residual, params))

    assert out.shape == (N, C, H, W), out.shape
    assert bool(jnp.all(jnp.isfinite(out)))
    print("KERNEL_OK")
</pallas_src>

<mosaic_0001>
module attributes {stable_mosaic.version = 11 : i64} {
  func.func @_gaf_kernel(%arg0: i32, %arg1: memref<1x64x256xbf16, #tpu.memory_space<vmem>>, %arg2: memref<1x64x256xbf16, #tpu.memory_space<vmem>>, %arg3: memref<16x64xbf16, #tpu.memory_space<vmem>>, %arg4: memref<64x16xbf16, #tpu.memory_space<vmem>>, %arg5: memref<16x64xbf16, #tpu.memory_space<vmem>>, %arg6: memref<64x16xbf16, #tpu.memory_space<vmem>>, %arg7: memref<16x64xbf16, #tpu.memory_space<vmem>>, %arg8: memref<64x16xbf16, #tpu.memory_space<vmem>>, %arg9: memref<16x3xf32, #tpu.memory_space<vmem>>, %arg10: memref<64x3xf32, #tpu.memory_space<vmem>>, %arg11: memref<1x64x256xbf16, #tpu.memory_space<vmem>>) attributes {dimension_semantics = [#tpu.dimension_semantics<parallel>], iteration_bounds = array<i64: 2>, scalar_prefetch = 0 : i64, scratch_operands = 0 : i64, tpu.core_type = #tpu.core_type<tc>, window_params = [{transform_indices = @transform_0, window_bounds = array<i64: 1, 64, 256>}, {transform_indices = @transform_1, window_bounds = array<i64: 1, 64, 256>}, {pipeline_mode = #tpu.pipeline_mode<synchronous>, transform_indices = @transform_2, window_bounds = array<i64: 16, 64>}, {pipeline_mode = #tpu.pipeline_mode<synchronous>, transform_indices = @transform_3, window_bounds = array<i64: 64, 16>}, {pipeline_mode = #tpu.pipeline_mode<synchronous>, transform_indices = @transform_4, window_bounds = array<i64: 16, 64>}, {pipeline_mode = #tpu.pipeline_mode<synchronous>, transform_indices = @transform_5, window_bounds = array<i64: 64, 16>}, {pipeline_mode = #tpu.pipeline_mode<synchronous>, transform_indices = @transform_6, window_bounds = array<i64: 16, 64>}, {pipeline_mode = #tpu.pipeline_mode<synchronous>, transform_indices = @transform_7, window_bounds = array<i64: 64, 16>}, {pipeline_mode = #tpu.pipeline_mode<synchronous>, transform_indices = @transform_8, window_bounds = array<i64: 16, 3>}, {pipeline_mode = #tpu.pipeline_mode<synchronous>, transform_indices = @transform_9, window_bounds = array<i64: 64, 3>}, {transform_indices = @transform_10, window_bounds = array<i64: 1, 64, 256>}]} {
    %c0 = arith.constant 0 : index
    %c0_0 = arith.constant 0 : index
    %c0_1 = arith.constant 0 : index
    %0 = vector.load %arg1[%c0, %c0_0, %c0_1] : memref<1x64x256xbf16, #tpu.memory_space<vmem>>, vector<1x64x256xbf16>
    %1 = vector.shape_cast %0 : vector<1x64x256xbf16> to vector<64x256xbf16>
    %2 = arith.extf %1 : vector<64x256xbf16> to vector<64x256xf32>
    %c0_2 = arith.constant 0 : index
    %c0_3 = arith.constant 0 : index
    %c0_4 = arith.constant 0 : index
    %3 = vector.load %arg2[%c0_2, %c0_3, %c0_4] : memref<1x64x256xbf16, #tpu.memory_space<vmem>>, vector<1x64x256xbf16>
    %4 = vector.shape_cast %3 : vector<1x64x256xbf16> to vector<64x256xbf16>
    %5 = arith.extf %4 : vector<64x256xbf16> to vector<64x256xf32>
    %6 = arith.subf %2, %5 : vector<64x256xf32>
    %7 = arith.addf %2, %5 : vector<64x256xf32>
    %cst = arith.constant dense<0.000000e+00> : vector<64xf32>
    %8 = vector.multi_reduction <add>, %7, %cst [1] : vector<64x256xf32> to vector<64xf32>
    %9 = vector.shape_cast %8 : vector<64xf32> to vector<64x1xf32>
    %cst_5 = arith.constant 2.560000e+02 : f32
    %10 = vector.broadcast %cst_5 : f32 to vector<64x1xf32>
    %11 = arith.divf %9, %10 : vector<64x1xf32>
    %12 = arith.truncf %7 : vector<64x256xf32> to vector<64x256xbf16>
    %c0_6 = arith.constant 0 : index
    %c0_7 = arith.constant 0 : index
    %13 = vector.load %arg3[%c0_6, %c0_7] : memref<16x64xbf16, #tpu.memory_space<vmem>>, vector<16x64xbf16>
    %cst_8 = arith.constant dense<0.000000e+00> : vector<16x256xf32>
    %14 = tpu.matmul %13, %12, %cst_8 {dimension_numbers = #tpu.dot_dimension_numbers<[1], [0], [0], [1], [0, 0, 1, 1], [], []>} : vector<16x64xbf16>, vector<64x256xbf16>, vector<16x256xf32> -> vector<16x256xf32>
    %c0_9 = arith.constant 0 : index
    %c0_10 = arith.constant 0 : index
    %15 = vector.load %arg9[%c0_9, %c0_10] : memref<16x3xf32, #tpu.memory_space<vmem>>, vector<16x1xf32>
    %16 = vector.broadcast %15 : vector<16x1xf32> to vector<16x256xf32>
    %17 = arith.addf %14, %16 : vector<16x256xf32>
    %cst_11 = arith.constant 0.000000e+00 : f32
    %18 = vector.broadcast %cst_11 : f32 to vector<16x256xf32>
    %19 = arith.maximumf %17, %18 : vector<16x256xf32>
    %c0_12 = arith.constant 0 : index
    %c0_13 = arith.constant 0 : index
    %20 = vector.load %arg4[%c0_12, %c0_13] : memref<64x16xbf16, #tpu.memory_space<vmem>>, vector<64x16xbf16>
    %21 = arith.truncf %19 : vector<16x256xf32> to vector<16x256xbf16>
    %cst_14 = arith.constant dense<0.000000e+00> : vector<64x256xf32>
    %22 = tpu.matmul %20, %21, %cst_14 {dimension_numbers = #tpu.dot_dimension_numbers<[1], [0], [0], [1], [0, 0, 1, 1], [], []>} : vector<64x16xbf16>, vector<16x256xbf16>, vector<64x256xf32> -> vector<64x256xf32>
    %c0_15 = arith.constant 0 : index
    %c0_16 = arith.constant 0 : index
    %23 = vector.load %arg10[%c0_15, %c0_16] : memref<64x3xf32, #tpu.memory_space<vmem>>, vector<64x1xf32>
    %24 = vector.broadcast %23 : vector<64x1xf32> to vector<64x256xf32>
    %25 = arith.addf %22, %24 : vector<64x256xf32>
    %26 = arith.truncf %11 : vector<64x1xf32> to vector<64x1xbf16>
    %c0_17 = arith.constant 0 : index
    %c0_18 = arith.constant 0 : index
    %27 = vector.load %arg5[%c0_17, %c0_18] : memref<16x64xbf16, #tpu.memory_space<vmem>>, vector<16x64xbf16>
    %cst_19 = arith.constant dense<0.000000e+00> : vector<16x1xf32>
    %28 = tpu.matmul %27, %26, %cst_19 {dimension_numbers = #tpu.dot_dimension_numbers<[1], [0], [0], [1], [0, 0, 1, 1], [], []>} : vector<16x64xbf16>, vector<64x1xbf16>, vector<16x1xf32> -> vector<16x1xf32>
    %c0_20 = arith.constant 0 : index
    %c1 = arith.constant 1 : index
    %29 = vector.load %arg9[%c0_20, %c1] : memref<16x3xf32, #tpu.memory_space<vmem>>, vector<16x1xf32>
    %30 = arith.addf %28, %29 : vector<16x1xf32>
    %cst_21 = arith.constant 0.000000e+00 : f32
    %31 = vector.broadcast %cst_21 : f32 to vector<16x1xf32>
    %32 = arith.maximumf %30, %31 : vector<16x1xf32>
    %c0_22 = arith.constant 0 : index
    %c0_23 = arith.constant 0 : index
    %33 = vector.load %arg6[%c0_22, %c0_23] : memref<64x16xbf16, #tpu.memory_space<vmem>>, vector<64x16xbf16>
    %34 = arith.truncf %32 : vector<16x1xf32> to vector<16x1xbf16>
    %cst_24 = arith.constant dense<0.000000e+00> : vector<64x1xf32>
    %35 = tpu.matmul %33, %34, %cst_24 {dimension_numbers = #tpu.dot_dimension_numbers<[1], [0], [0], [1], [0, 0, 1, 1], [], []>} : vector<64x16xbf16>, vector<16x1xbf16>, vector<64x1xf32> -> vector<64x1xf32>
    %c0_25 = arith.constant 0 : index
    %c1_26 = arith.constant 1 : index
    %36 = vector.load %arg10[%c0_25, %c1_26] : memref<64x3xf32, #tpu.memory_space<vmem>>, vector<64x1xf32>
    %37 = arith.addf %35, %36 : vector<64x1xf32>
    %38 = vector.broadcast %37 : vector<64x1xf32> to vector<64x256xf32>
    %39 = arith.addf %25, %38 : vector<64x256xf32>
    %40 = arith.negf %39 : vector<64x256xf32>
    %41 = math.exp %40 : vector<64x256xf32>
    %cst_27 = arith.constant 1.000000e+00 : f32
    %42 = vector.broadcast %cst_27 : f32 to vector<64x256xf32>
    %43 = arith.addf %42, %41 : vector<64x256xf32>
    %44 = arith.divf %42, %43 : vector<64x256xf32>
    %45 = arith.mulf %6, %44 : vector<64x256xf32>
    %46 = arith.addf %5, %45 : vector<64x256xf32>
    %cst_28 = arith.constant dense<0.000000e+00> : vector<64xf32>
    %47 = vector.multi_reduction <add>, %46, %cst_28 [1] : vector<64x256xf32> to vector<64xf32>
    %48 = vector.shape_cast %47 : vector<64xf32> to vector<64x1xf32>
    %cst_29 = arith.constant 2.560000e+02 : f32
    %49 = vector.broadcast %cst_29 : f32 to vector<64x1xf32>
    %50 = arith.divf %48, %49 : vector<64x1xf32>
    %51 = arith.truncf %46 : vector<64x256xf32> to vector<64x256xbf16>
    %c0_30 = arith.constant 0 : index
    %c0_31 = arith.constant 0 : index
    %52 = vector.load %arg7[%c0_30, %c0_31] : memref<16x64xbf16, #tpu.memory_space<vmem>>, vector<16x64xbf16>
    %cst_32 = arith.constant dense<0.000000e+00> : vector<16x256xf32>
    %53 = tpu.matmul %52, %51, %cst_32 {dimension_numbers = #tpu.dot_dimension_numbers<[1], [0], [0], [1], [0, 0, 1, 1], [], []>} : vector<16x64xbf16>, vector<64x256xbf16>, vector<16x256xf32> -> vector<16x256xf32>
    %c0_33 = arith.constant 0 : index
    %c2 = arith.constant 2 : index
    %54 = vector.load %arg9[%c0_33, %c2] : memref<16x3xf32, #tpu.memory_space<vmem>>, vector<16x1xf32>
    %55 = vector.broadcast %54 : vector<16x1xf32> to vector<16x256xf32>
    %56 = arith.addf %53, %55 : vector<16x256xf32>
    %cst_34 = arith.constant 0.000000e+00 : f32
    %57 = vector.broadcast %cst_34 : f32 to vector<16x256xf32>
    %58 = arith.maximumf %56, %57 : vector<16x256xf32>
    %c0_35 = arith.constant 0 : index
    %c0_36 = arith.constant 0 : index
    %59 = vector.load %arg8[%c0_35, %c0_36] : memref<64x16xbf16, #tpu.memory_space<vmem>>, vector<64x16xbf16>
    %60 = arith.truncf %58 : vector<16x256xf32> to vector<16x256xbf16>
    %cst_37 = arith.constant dense<0.000000e+00> : vector<64x256xf32>
    %61 = tpu.matmul %59, %60, %cst_37 {dimension_numbers = #tpu.dot_dimension_numbers<[1], [0], [0], [1], [0, 0, 1, 1], [], []>} : vector<64x16xbf16>, vector<16x256xbf16>, vector<64x256xf32> -> vector<64x256xf32>
    %c0_38 = arith.constant 0 : index
    %c2_39 = arith.constant 2 : index
    %62 = vector.load %arg10[%c0_38, %c2_39] : memref<64x3xf32, #tpu.memory_space<vmem>>, vector<64x1xf32>
    %63 = vector.broadcast %62 : vector<64x1xf32> to vector<64x256xf32>
    %64 = arith.addf %61, %63 : vector<64x256xf32>
    %65 = arith.truncf %50 : vector<64x1xf32> to vector<64x1xbf16>
    %c0_40 = arith.constant 0 : index
    %c0_41 = arith.constant 0 : index
    %66 = vector.load %arg5[%c0_40, %c0_41] : memref<16x64xbf16, #tpu.memory_space<vmem>>, vector<16x64xbf16>
    %cst_42 = arith.constant dense<0.000000e+00> : vector<16x1xf32>
    %67 = tpu.matmul %66, %65, %cst_42 {dimension_numbers = #tpu.dot_dimension_numbers<[1], [0], [0], [1], [0, 0, 1, 1], [], []>} : vector<16x64xbf16>, vector<64x1xbf16>, vector<16x1xf32> -> vector<16x1xf32>
    %c0_43 = arith.constant 0 : index
    %c1_44 = arith.constant 1 : index
    %68 = vector.load %arg9[%c0_43, %c1_44] : memref<16x3xf32, #tpu.memory_space<vmem>>, vector<16x1xf32>
    %69 = arith.addf %67, %68 : vector<16x1xf32>
    %cst_45 = arith.constant 0.000000e+00 : f32
    %70 = vector.broadcast %cst_45 : f32 to vector<16x1xf32>
    %71 = arith.maximumf %69, %70 : vector<16x1xf32>
    %c0_46 = arith.constant 0 : index
    %c0_47 = arith.constant 0 : index
    %72 = vector.load %arg6[%c0_46, %c0_47] : memref<64x16xbf16, #tpu.memory_space<vmem>>, vector<64x16xbf16>
    %73 = arith.truncf %71 : vector<16x1xf32> to vector<16x1xbf16>
    %cst_48 = arith.constant dense<0.000000e+00> : vector<64x1xf32>
    %74 = tpu.matmul %72, %73, %cst_48 {dimension_numbers = #tpu.dot_dimension_numbers<[1], [0], [0], [1], [0, 0, 1, 1], [], []>} : vector<64x16xbf16>, vector<16x1xbf16>, vector<64x1xf32> -> vector<64x1xf32>
    %c0_49 = arith.constant 0 : index
    %c1_50 = arith.constant 1 : index
    %75 = vector.load %arg10[%c0_49, %c1_50] : memref<64x3xf32, #tpu.memory_space<vmem>>, vector<64x1xf32>
    %76 = arith.addf %74, %75 : vector<64x1xf32>
    %77 = vector.broadcast %76 : vector<64x1xf32> to vector<64x256xf32>
    %78 = arith.addf %64, %77 : vector<64x256xf32>
    %79 = arith.negf %78 : vector<64x256xf32>
    %80 = math.exp %79 : vector<64x256xf32>
    %cst_51 = arith.constant 1.000000e+00 : f32
    %81 = vector.broadcast %cst_51 : f32 to vector<64x256xf32>
    %82 = arith.addf %81, %80 : vector<64x256xf32>
    %83 = arith.divf %81, %82 : vector<64x256xf32>
    %84 = arith.mulf %6, %83 : vector<64x256xf32>
    %85 = arith.addf %5, %84 : vector<64x256xf32>
    %86 = arith.truncf %85 : vector<64x256xf32> to vector<64x256xbf16>
    %c0_52 = arith.constant 0 : index
    %c0_53 = arith.constant 0 : index
    %c0_54 = arith.constant 0 : index
    %87 = vector.load %arg11[%c0_52, %c0_53, %c0_54] : memref<1x64x256xbf16, #tpu.memory_space<vmem>>, vector<1x64x256xbf16>
    %88 = vector.shape_cast %87 : vector<1x64x256xbf16> to vector<64x256xbf16>
    %89 = vector.shape_cast %86 : vector<64x256xbf16> to vector<1x64x256xbf16>
    tpu.vector_store %arg11[%c0_52, %c0_53, %c0_54], %89 {strides = array<i32>} : memref<1x64x256xbf16, #tpu.memory_space<vmem>>, vector<1x64x256xbf16>,
    return
  }
  func.func @transform_0(%arg0: i32) -> (i32, i32, i32) {
    %c0_i32 = arith.constant 0 : i32
    %c0_i32_0 = arith.constant 0 : i32
    %c0_i32_1 = arith.constant 0 : i32
    return %arg0, %c0_i32, %c0_i32_0 : i32, i32, i32
  }
  func.func @transform_1(%arg0: i32) -> (i32, i32, i32) {
    %c0_i32 = arith.constant 0 : i32
    %c0_i32_0 = arith.constant 0 : i32
    %c0_i32_1 = arith.constant 0 : i32
    return %arg0, %c0_i32, %c0_i32_0 : i32, i32, i32
  }
  func.func @transform_2(%arg0: i32) -> (i32, i32) {
    %c0_i32 = arith.constant 0 : i32
    %c0_i32_0 = arith.constant 0 : i32
    %c0_i32_1 = arith.constant 0 : i32
    return %c0_i32, %c0_i32_0 : i32, i32
  }
  func.func @transform_3(%arg0: i32) -> (i32, i32) {
    %c0_i32 = arith.constant 0 : i32
    %c0_i32_0 = arith.constant 0 : i32
    %c0_i32_1 = arith.constant 0 : i32
    return %c0_i32, %c0_i32_0 : i32, i32
  }
  func.func @transform_4(%arg0: i32) -> (i32, i32) {
    %c0_i32 = arith.constant 0 : i32
    %c0_i32_0 = arith.constant 0 : i32
    %c0_i32_1 = arith.constant 0 : i32
    return %c0_i32, %c0_i32_0 : i32, i32
  }
  func.func @transform_5(%arg0: i32) -> (i32, i32) {
    %c0_i32 = arith.constant 0 : i32
    %c0_i32_0 = arith.constant 0 : i32
    %c0_i32_1 = arith.constant 0 : i32
    return %c0_i32, %c0_i32_0 : i32, i32
  }
  func.func @transform_6(%arg0: i32) -> (i32, i32) {
    %c0_i32 = arith.constant 0 : i32
    %c0_i32_0 = arith.constant 0 : i32
    %c0_i32_1 = arith.constant 0 : i32
    return %c0_i32, %c0_i32_0 : i32, i32
  }
  func.func @transform_7(%arg0: i32) -> (i32, i32) {
    %c0_i32 = arith.constant 0 : i32
    %c0_i32_0 = arith.constant 0 : i32
    %c0_i32_1 = arith.constant 0 : i32
    return %c0_i32, %c0_i32_0 : i32, i32
  }
  func.func @transform_8(%arg0: i32) -> (i32, i32) {
    %c0_i32 = arith.constant 0 : i32
    %c0_i32_0 = arith.constant 0 : i32
    %c0_i32_1 = arith.constant 0 : i32
    return %c0_i32, %c0_i32_0 : i32, i32
  }
  func.func @transform_9(%arg0: i32) -> (i32, i32) {
    %c0_i32 = arith.constant 0 : i32
    %c0_i32_0 = arith.constant 0 : i32
    %c0_i32_1 = arith.constant 0 : i32
    return %c0_i32, %c0_i32_0 : i32, i32
  }
  func.func @transform_10(%arg0: i32) -> (i32, i32, i32) {
    %c0_i32 = arith.constant 0 : i32
    %c0_i32_0 = arith.constant 0 : i32
    %c0_i32_1 = arith.constant 0 : i32
    return %arg0, %c0_i32, %c0_i32_0 : i32, i32, i32
  }
}

</mosaic_0001>

<llo_original>
// kernel: gaf_forward.1
$region0: #{gaf_forward.1}
  #allocation0 [shape = 'u32[]', space=smem, size = 0x4, offset = 0x4, fixed_abs, tag = 'smem constant byte address 0x4 - core index']
  #allocation1 [shape = 'u32[144,128]{1,0:T(1,128)}', space=vmem, size = 0x12000, scoped, tag = 'internal scratch']
  %s0 = inlined_call_operand.vmem [shape: bf16[2,64,256], index: 0, kind: input, shape index: {}]
  %s1 = inlined_call_operand.vmem [shape: bf16[2,64,256], index: 1, kind: input, shape index: {}]
  %s2 = inlined_call_operand.vmem [shape: bf16[16,64], index: 2, kind: input, shape index: {}]
  %s3 = inlined_call_operand.vmem [shape: bf16[64,16], index: 3, kind: input, shape index: {}]
  %s4 = inlined_call_operand.vmem [shape: bf16[16,64], index: 4, kind: input, shape index: {}]
  %s5 = inlined_call_operand.vmem [shape: bf16[64,16], index: 5, kind: input, shape index: {}]
  %s6 = inlined_call_operand.vmem [shape: bf16[16,64], index: 6, kind: input, shape index: {}]
  %s7 = inlined_call_operand.vmem [shape: bf16[64,16], index: 7, kind: input, shape index: {}]
  %s8 = inlined_call_operand.vmem [shape: f32[16,3], index: 8, kind: input, shape index: {}]
  %s9 = inlined_call_operand.vmem [shape: f32[64,3], index: 9, kind: input, shape index: {}]
  %s10 = inlined_call_operand.vmem [shape: bf16[2,64,256], index: 10, kind: output, shape index: {}]
  %s11 = sld [smem:[#allocation0]]
  $region73: #{gaf_forward.1} parent=0
    _
  %s13 = ssub.s32 1, %s11
  %s14 = scalar_select 0, %s13, %s11
  loop: start=0, step=1, limit=4
  $region2: #{gaf_forward.1} parent=0 // loop_pre_header
    _
  $region3: #{gaf_forward.1} parent=0 // loop_header
    %s16 = sphi 0, %s20
    %p17 = scmp.ge.s32.totalorder %s16, 4
    %s26 = sphi 0, %s28
    %s29 = sphi 0, %s26
    %s30 = sphi 0, %s29
    %s46 = sphi 0, %s30
    %s52 = sphi 0, %s54
    %s55 = sphi 0, %s52
    %s56 = sphi 0, %s55
    %s72 = sphi 0, %s56
    %s76 = sphi 0, %s76
    %s78 = sphi 0, %s76
    %s79 = sphi 0, %s78
    %s93 = sphi 0, %s79
    %s97 = sphi 0, %s97
    %s99 = sphi 0, %s97
    %s100 = sphi 0, %s99
    %s114 = sphi 0, %s100
    %s118 = sphi 0, %s118
    %s120 = sphi 0, %s118
    %s121 = sphi 0, %s120
    %s135 = sphi 0, %s121
    %s139 = sphi 0, %s139
    %s141 = sphi 0, %s139
    %s142 = sphi 0, %s141
    %s156 = sphi 0, %s142
    %s160 = sphi 0, %s160
    %s162 = sphi 0, %s160
    %s163 = sphi 0, %s162
    %s177 = sphi 0, %s163
    %s181 = sphi 0, %s181
    %s183 = sphi 0, %s181
    %s184 = sphi 0, %s183
    %s198 = sphi 0, %s184
    %s202 = sphi 0, %s202
    %s204 = sphi 0, %s202
    %s205 = sphi 0, %s204
    %s219 = sphi 0, %s205
    %s223 = sphi 0, %s223
    %s225 = sphi 0, %s223
    %s226 = sphi 0, %s225
    %s240 = sphi 0, %s226
    %s246 = sphi 0, %s248
    %s249 = sphi 0, %s246
    %s250 = sphi 0, %s249
    %s266 = sphi 0, %s250
  $region4: #{gaf_forward.1} parent=0 // loop_header_branch
    %19 = sbr.rel (%p17) target = $region8
  $region5: #{gaf_forward.1} parent=0 // loop_body
    %s21 = ssub.s32 %s16, 1
    %s22 = ssub.s32 %s16, 2
    %s23 = sadd.s32 %s16, 1
    %s24 = ssub.s32 %s16, %s23
    %p25 = scmp.eq.s32.totalorder %s24, 0
    %s27 = sadd.s32 %s26, 1
    %s28 = scalar_select %p25, %s26, %s27
    %p31 = pneg %p25
    %p32 = scmp.eq.s32.totalorder %s16, 1
    %p33 = por %p31, %p32
    %p34 = scmp.ne.s32.totalorder %s26, %s29
    %p35 = scmp.eq.s32.totalorder %s16, 0
    %p36 = por %p34, %p35
    %p37 = scmp.ne.s32.totalorder %s26, %s29
    %p38 = scmp.eq.s32.totalorder %s21, 1
    %p39 = por %p37, %p38
    %p40 = scmp.ne.s32.totalorder %s29, %s30
    %p41 = scmp.eq.s32.totalorder %s21, 0
    %p42 = por %p40, %p41
    %p43 = scmp.ne.s32.totalorder %s29, %s30
    %p44 = scmp.eq.s32.totalorder %s22, 1
    %p45 = por %p43, %p44
    %p47 = scmp.ne.s32.totalorder %s30, %s46
    %p48 = scmp.eq.s32.totalorder %s22, 0
    %p49 = por %p47, %p48
    %s50 = ssub.s32 %s16, %s23
    %p51 = scmp.eq.s32.totalorder %s50, 0
    %s53 = sadd.s32 %s52, 1
    %s54 = scalar_select %p51, %s52, %s53
    %p57 = pneg %p51
    %p58 = scmp.eq.s32.totalorder %s16, 1
    %p59 = por %p57, %p58
    %p60 = scmp.ne.s32.totalorder %s52, %s55
    %p61 = scmp.eq.s32.totalorder %s16, 0
    %p62 = por %p60, %p61
    %p63 = scmp.ne.s32.totalorder %s52, %s55
    %p64 = scmp.eq.s32.totalorder %s21, 1
    %p65 = por %p63, %p64
    %p66 = scmp.ne.s32.totalorder %s55, %s56
    %p67 = scmp.eq.s32.totalorder %s21, 0
    %p68 = por %p66, %p67
    %p69 = scmp.ne.s32.totalorder %s55, %s56
    %p70 = scmp.eq.s32.totalorder %s22, 1
    %p71 = por %p69, %p70
    %p73 = scmp.ne.s32.totalorder %s56, %s72
    %p74 = scmp.eq.s32.totalorder %s22, 0
    %p75 = por %p73, %p74
    %s77 = sadd.s32 %s76, 1
    %p80 = scmp.eq.s32.totalorder %s16, 1
    %p81 = scmp.ne.s32.totalorder %s76, %s78
    %p82 = scmp.eq.s32.totalorder %s16, 0
    %p83 = por %p81, %p82
    %p84 = scmp.ne.s32.totalorder %s76, %s78
    %p85 = scmp.eq.s32.totalorder %s21, 1
    %p86 = por %p84, %p85
    %p87 = scmp.ne.s32.totalorder %s78, %s79
    %p88 = scmp.eq.s32.totalorder %s21, 0
    %p89 = por %p87, %p88
    %p90 = scmp.ne.s32.totalorder %s78, %s79
    %p91 = scmp.eq.s32.totalorder %s22, 1
    %p92 = por %p90, %p91
    %p94 = scmp.ne.s32.totalorder %s79, %s93
    %p95 = scmp.eq.s32.totalorder %s22, 0
    %p96 = por %p94, %p95
    %s98 = sadd.s32 %s97, 1
    %p101 = scmp.eq.s32.totalorder %s16, 1
    %p102 = scmp.ne.s32.totalorder %s97, %s99
    %p103 = scmp.eq.s32.totalorder %s16, 0
    %p104 = por %p102, %p103
    %p105 = scmp.ne.s32.totalorder %s97, %s99
    %p106 = scmp.eq.s32.totalorder %s21, 1
    %p107 = por %p105, %p106
    %p108 = scmp.ne.s32.totalorder %s99, %s100
    %p109 = scmp.eq.s32.totalorder %s21, 0
    %p110 = por %p108, %p109
    %p111 = scmp.ne.s32.totalorder %s99, %s100
    %p112 = scmp.eq.s32.totalorder %s22, 1
    %p113 = por %p111, %p112
    %p115 = scmp.ne.s32.totalorder %s100, %s114
    %p116 = scmp.eq.s32.totalorder %s22, 0
    %p117 = por %p115, %p116
    %s119 = sadd.s32 %s118, 1
    %p122 = scmp.eq.s32.totalorder %s16, 1
    %p123 = scmp.ne.s32.totalorder %s118, %s120
    %p124 = scmp.eq.s32.totalorder %s16, 0
    %p125 = por %p123, %p124
    %p126 = scmp.ne.s32.totalorder %s118, %s120
    %p127 = scmp.eq.s32.totalorder %s21, 1
    %p128 = por %p126, %p127
    %p129 = scmp.ne.s32.totalorder %s120, %s121
    %p130 = scmp.eq.s32.totalorder %s21, 0
    %p131 = por %p129, %p130
    %p132 = scmp.ne.s32.totalorder %s120, %s121
    %p133 = scmp.eq.s32.totalorder %s22, 1
    %p134 = por %p132, %p133
    %p136 = scmp.ne.s32.totalorder %s121, %s135
    %p137 = scmp.eq.s32.totalorder %s22, 0
    %p138 = por %p136, %p137
    %s140 = sadd.s32 %s139, 1
    %p143 = scmp.eq.s32.totalorder %s16, 1
    %p144 = scmp.ne.s32.totalorder %s139, %s141
    %p145 = scmp.eq.s32.totalorder %s16, 0
    %p146 = por %p144, %p145
    %p147 = scmp.ne.s32.totalorder %s139, %s141
    %p148 = scmp.eq.s32.totalorder %s21, 1
    %p149 = por %p147, %p148
    %p150 = scmp.ne.s32.totalorder %s141, %s142
    %p151 = scmp.eq.s32.totalorder %s21, 0
    %p152 = por %p150, %p151
    %p153 = scmp.ne.s32.totalorder %s141, %s142
    %p154 = scmp.eq.s32.totalorder %s22, 1
    %p155 = por %p153, %p154
    %p157 = scmp.ne.s32.totalorder %s142, %s156
    %p158 = scmp.eq.s32.totalorder %s22, 0
    %p159 = por %p157, %p158
    %s161 = sadd.s32 %s160, 1
    %p164 = scmp.eq.s32.totalorder %s16, 1
    %p165 = scmp.ne.s32.totalorder %s160, %s162
    %p166 = scmp.eq.s32.totalorder %s16, 0
    %p167 = por %p165, %p166
    %p168 = scmp.ne.s32.totalorder %s160, %s162
    %p169 = scmp.eq.s32.totalorder %s21, 1
    %p170 = por %p168, %p169
    %p171 = scmp.ne.s32.totalorder %s162, %s163
    %p172 = scmp.eq.s32.totalorder %s21, 0
    %p173 = por %p171, %p172
    %p174 = scmp.ne.s32.totalorder %s162, %s163
    %p175 = scmp.eq.s32.totalorder %s22, 1
    %p176 = por %p174, %p175
    %p178 = scmp.ne.s32.totalorder %s163, %s177
    %p179 = scmp.eq.s32.totalorder %s22, 0
    %p180 = por %p178, %p179
    %s182 = sadd.s32 %s181, 1
    %p185 = scmp.eq.s32.totalorder %s16, 1
    %p186 = scmp.ne.s32.totalorder %s181, %s183
    %p187 = scmp.eq.s32.totalorder %s16, 0
    %p188 = por %p186, %p187
    %p189 = scmp.ne.s32.totalorder %s181, %s183
    %p190 = scmp.eq.s32.totalorder %s21, 1
    %p191 = por %p189, %p190
    %p192 = scmp.ne.s32.totalorder %s183, %s184
    %p193 = scmp.eq.s32.totalorder %s21, 0
    %p194 = por %p192, %p193
    %p195 = scmp.ne.s32.totalorder %s183, %s184
    %p196 = scmp.eq.s32.totalorder %s22, 1
    %p197 = por %p195, %p196
    %p199 = scmp.ne.s32.totalorder %s184, %s198
    %p200 = scmp.eq.s32.totalorder %s22, 0
    %p201 = por %p199, %p200
    %s203 = sadd.s32 %s202, 1
    %p206 = scmp.eq.s32.totalorder %s16, 1
    %p207 = scmp.ne.s32.totalorder %s202, %s204
    %p208 = scmp.eq.s32.totalorder %s16, 0
    %p209 = por %p207, %p208
    %p210 = scmp.ne.s32.totalorder %s202, %s204
    %p211 = scmp.eq.s32.totalorder %s21, 1
    %p212 = por %p210, %p211
    %p213 = scmp.ne.s32.totalorder %s204, %s205
    %p214 = scmp.eq.s32.totalorder %s21, 0
    %p215 = por %p213, %p214
    %p216 = scmp.ne.s32.totalorder %s204, %s205
    %p217 = scmp.eq.s32.totalorder %s22, 1
    %p218 = por %p216, %p217
    %p220 = scmp.ne.s32.totalorder %s205, %s219
    %p221 = scmp.eq.s32.totalorder %s22, 0
    %p222 = por %p220, %p221
    %s224 = sadd.s32 %s223, 1
    %p227 = scmp.eq.s32.totalorder %s16, 1
    %p228 = scmp.ne.s32.totalorder %s223, %s225
    %p229 = scmp.eq.s32.totalorder %s16, 0
    %p230 = por %p228, %p229
    %p231 = scmp.ne.s32.totalorder %s223, %s225
    %p232 = scmp.eq.s32.totalorder %s21, 1
    %p233 = por %p231, %p232
    %p234 = scmp.ne.s32.totalorder %s225, %s226
    %p235 = scmp.eq.s32.totalorder %s21, 0
    %p236 = por %p234, %p235
    %p237 = scmp.ne.s32.totalorder %s225, %s226
    %p238 = scmp.eq.s32.totalorder %s22, 1
    %p239 = por %p237, %p238
    %p241 = scmp.ne.s32.totalorder %s226, %s240
    %p242 = scmp.eq.s32.totalorder %s22, 0
    %p243 = por %p241, %p242
    %s244 = ssub.s32 %s16, %s23
    %p245 = scmp.eq.s32.totalorder %s244, 0
    %s247 = sadd.s32 %s246, 1
    %s248 = scalar_select %p245, %s246, %s247
    %p251 = pneg %p245
    %p252 = scmp.eq.s32.totalorder %s16, 1
    %p253 = por %p251, %p252
    %p254 = scmp.ne.s32.totalorder %s246, %s249
    %p255 = scmp.eq.s32.totalorder %s16, 0
    %p256 = por %p254, %p255
    %p257 = scmp.ne.s32.totalorder %s246, %s249
    %p258 = scmp.eq.s32.totalorder %s21, 1
    %p259 = por %p257, %p258
    %p260 = scmp.ne.s32.totalorder %s249, %s250
    %p261 = scmp.eq.s32.totalorder %s21, 0
    %p262 = por %p260, %p261
    %p263 = scmp.ne.s32.totalorder %s249, %s250
    %p264 = scmp.eq.s32.totalorder %s22, 1
    %p265 = por %p263, %p264
    %p267 = scmp.ne.s32.totalorder %s250, %s266
    %p268 = scmp.eq.s32.totalorder %s22, 0
    %p269 = por %p267, %p268
    %p270 = scmp.le.s32.totalorder 1, %s16
    %p271 = scmp.lt.s32.totalorder %s16, 3
    %p272 = pnand %p270, %p271
    %p273 = pneg %p272
    // Predicated region
    $region9: #{gaf_forward.1} parent=5 // pred_check
      _
    $region10: #{gaf_forward.1} parent=5 // pred_check_branch
      %275 = sbr.rel (%p272) target = $region12
    $region11: #{gaf_forward.1} parent=5 // pred_region
      %s276 = ssub.s32 %s16, 1
      // Predicated region
      $region13: #{gaf_forward.1} parent=11 // pred_check
        %p277 = pneg %p89
      $region14: #{gaf_forward.1} parent=11 // pred_check_branch
        %279 = sbr.rel (%p277) target = $region16
      $region15: #{gaf_forward.1} parent=11 // pred_region
        _
      $region16: #{gaf_forward.1} parent=11 // pred_fallthru
        _
      // Predicated region
      $region17: #{gaf_forward.1} parent=11 // pred_check
        %p280 = pneg %p110
      $region18: #{gaf_forward.1} parent=11 // pred_check_branch
        %282 = sbr.rel (%p280) target = $region20
      $region19: #{gaf_forward.1} parent=11 // pred_region
        _
      $region20: #{gaf_forward.1} parent=11 // pred_fallthru
        _
      // Predicated region
      $region21: #{gaf_forward.1} parent=11 // pred_check
        %p283 = pneg %p131
      $region22: #{gaf_forward.1} parent=11 // pred_check_branch
        %285 = sbr.rel (%p283) target = $region24
      $region23: #{gaf_forward.1} parent=11 // pred_region
        _
      $region24: #{gaf_forward.1} parent=11 // pred_fallthru
        _
      // Predicated region
      $region25: #{gaf_forward.1} parent=11 // pred_check
        %p286 = pneg %p152
      $region26: #{gaf_forward.1} parent=11 // pred_check_branch
        %288 = sbr.rel (%p286) target = $region28
      $region27: #{gaf_forward.1} parent=11 // pred_region
        _
      $region28: #{gaf_forward.1} parent=11 // pred_fallthru
        _
      // Predicated region
      $region29: #{gaf_forward.1} parent=11 // pred_check
        %p289 = pneg %p173
      $region30: #{gaf_forward.1} parent=11 // pred_check_branch
        %291 = sbr.rel (%p289) target = $region32
      $region31: #{gaf_forward.1} parent=11 // pred_region
        _
      $region32: #{gaf_forward.1} parent=11 // pred_fallthru
        _
      // Predicated region
      $region33: #{gaf_forward.1} parent=11 // pred_check
        %p292 = pneg %p194
      $region34: #{gaf_forward.1} parent=11 // pred_check_branch
        %294 = sbr.rel (%p292) target = $region36
      $region35: #{gaf_forward.1} parent=11 // pred_region
        _
      $region36: #{gaf_forward.1} parent=11 // pred_fallthru
        _
      // Predicated region
      $region37: #{gaf_forward.1} parent=11 // pred_check
        %p295 = pneg %p215
      $region38: #{gaf_forward.1} parent=11 // pred_check_branch
        %297 = sbr.rel (%p295) target = $region40
      $region39: #{gaf_forward.1} parent=11 // pred_region
        _
      $region40: #{gaf_forward.1} parent=11 // pred_fallthru
        _
      // Predicated region
      $region41: #{gaf_forward.1} parent=11 // pred_check
        %p298 = pneg %p236
      $region42: #{gaf_forward.1} parent=11 // pred_check_branch
        %300 = sbr.rel (%p298) target = $region44
      $region43: #{gaf_forward.1} parent=11 // pred_region
        _
      $region44: #{gaf_forward.1} parent=11 // pred_fallthru
        _
    $region12: #{gaf_forward.1} parent=5 // pred_fallthru
      _
    %p301 = scmp.lt.s32.totalorder %s16, 2
    // Predicated region
    $region45: #{gaf_forward.1} parent=5 // pred_check
      %p302 = pneg %p301
    $region46: #{gaf_forward.1} parent=5 // pred_check_branch
      %304 = sbr.rel (%p302) target = $region48
    $region47: #{gaf_forward.1} parent=5 // pred_region
      // Predicated region
      $region49: #{gaf_forward.1} parent=47 // pred_check
        %p305 = pneg %p36
      $region50: #{gaf_forward.1} parent=47 // pred_check_branch
        %307 = sbr.rel (%p305) target = $region52
      $region51: #{gaf_forward.1} parent=47 // pred_region
        %p308 = scmp.lt.s32.totalorder %s16, 1
        %s309 = scalar_select %p308, %s16, 1
        %s310 = smul.addr %s309, 16
        %s311 = smul.addr %s310, 4
        %s312 = scalar_lea.vmem %s0, %s311
      $region52: #{gaf_forward.1} parent=47 // pred_fallthru
        _
      // Predicated region
      $region53: #{gaf_forward.1} parent=47 // pred_check
        %p313 = pneg %p62
      $region54: #{gaf_forward.1} parent=47 // pred_check_branch
        %315 = sbr.rel (%p313) target = $region56
      $region55: #{gaf_forward.1} parent=47 // pred_region
        %p316 = scmp.lt.s32.totalorder %s16, 1
        %s317 = scalar_select %p316, %s16, 1
        %s318 = smul.addr %s317, 16
        %s319 = smul.addr %s318, 4
        %s320 = scalar_lea.vmem %s1, %s319
      $region56: #{gaf_forward.1} parent=47 // pred_fallthru
        _
    $region48: #{gaf_forward.1} parent=5 // pred_fallthru
      _
    %p321 = scmp.le.s32.totalorder 1, %s16
    %p322 = scmp.lt.s32.totalorder %s16, 3
    %p323 = pnand %p321, %p322
    %p324 = pneg %p323
    // Predicated region
    $region57: #{gaf_forward.1} parent=5 // pred_check
      _
    $region58: #{gaf_forward.1} parent=5 // pred_check_branch
      %326 = sbr.rel (%p323) target = $region60
    $region59: #{gaf_forward.1} parent=5 // pred_region
      %s327 = ssub.s32 %s16, 1
      %p328 = scmp.lt.s32.totalorder %s21, 1
      %s329 = scalar_select %p328, %s21, 1
      %s330 = smul.addr %s329, 16
      %s331 = smul.addr %s330, 4
      %s332 = scalar_lea.vmem %s0, %s331
      %p333 = pneg %p42
      %p334 = pneg %p39
      %p335 = scmp.lt.s32.totalorder %s21, 1
      %s336 = scalar_select %p335, %s21, 1
      %s337 = smul.addr %s336, 16
      %s338 = smul.addr %s337, 4
      %s339 = scalar_lea.vmem %s1, %s338
      %p340 = pneg %p68
      %p341 = pneg %p65
      %p342 = pneg %p89
      %p343 = pneg %p86
      %p344 = pneg %p110
      %p345 = pneg %p107
      %p346 = pneg %p131
      %p347 = pneg %p128
      %p348 = pneg %p152
      %p349 = pneg %p149
      %p350 = pneg %p173
      %p351 = pneg %p170
      %p352 = pneg %p194
      %p353 = pneg %p191
      %p354 = pneg %p215
      %p355 = pneg %p212
      %p356 = pneg %p236
      %p357 = pneg %p233
      %p358 = pneg %p262
      %p359 = pneg %p259
      %p360 = scmp.lt.s32.totalorder %s21, 1
      %s361 = scalar_select %p360, %s21, 1
      %s362 = smul.addr %s361, 16
      %s363 = smul.addr %s362, 4
      %s364 = scalar_lea.vmem %s10, %s363
      %p365 = scmp.lt.s32.totalorder %s21, 1
      %s366 = scalar_select %p365, %s21, 1
      %s367 = smul.addr %s366, 16
      %s368 = smul.addr %s367, 4
      %s369 = scalar_lea.vmem %s0, %s368
      %p370 = scmp.lt.s32.totalorder %s21, 1
      %s371 = scalar_select %p370, %s21, 1
      %s372 = smul.addr %s371, 16
      %s373 = smul.addr %s372, 4
      %s374 = scalar_lea.vmem %s1, %s373
      %p375 = scmp.lt.s32.totalorder %s21, 1
      %s376 = scalar_select %p375, %s21, 1
      %s377 = smul.addr %s376, 16
      %s378 = smul.addr %s377, 4
      %s379 = scalar_lea.vmem %s10, %s378
      %v381 = vld [vmem:[%s369] sm:$0xff]
      %v382 = vld [vmem:[%s369 + $0x8] sm:$0xff]
      %v383 = vld [vmem:[%s369 + $0x10] sm:$0xff]
      %v384 = vld [vmem:[%s369 + $0x18] sm:$0xff]
      %v385 = vld [vmem:[%s369 + $0x20] sm:$0xff]
      %v386 = vld [vmem:[%s369 + $0x28] sm:$0xff]
      %v387 = vld [vmem:[%s369 + $0x30] sm:$0xff]
      %v388 = vld [vmem:[%s369 + $0x38] sm:$0xff]
      %v389 = vunpack.c.l.bf16 %v381
      %v390 = vunpack.c.h.bf16 %v381
      %v391 = vunpack.c.l.bf16 %v382
      %v392 = vunpack.c.h.bf16 %v382
      %v393 = vunpack.c.l.bf16 %v383
      %v394 = vunpack.c.h.bf16 %v383
      %v395 = vunpack.c.l.bf16 %v384
      %v396 = vunpack.c.h.bf16 %v384
      %v397 = vunpack.c.l.bf16 %v385
      %v398 = vunpack.c.h.bf16 %v385
      %v399 = vunpack.c.l.bf16 %v386
      %v400 = vunpack.c.h.bf16 %v386
      %v401 = vunpack.c.l.bf16 %v387
      %v402 = vunpack.c.h.bf16 %v387
      %v403 = vunpack.c.l.bf16 %v388
      %v404 = vunpack.c.h.bf16 %v388
      %v405 = vld [vmem:[%s374] sm:$0xff]
      %v406 = vld [vmem:[%s374 + $0x8] sm:$0xff]
      %v407 = vld [vmem:[%s374 + $0x10] sm:$0xff]
      %v408 = vld [vmem:[%s374 + $0x18] sm:$0xff]
      %v409 = vld [vmem:[%s374 + $0x20] sm:$0xff]
      %v410 = vld [vmem:[%s374 + $0x28] sm:$0xff]
      %v411 = vld [vmem:[%s374 + $0x30] sm:$0xff]
      %v412 = vld [vmem:[%s374 + $0x38] sm:$0xff]
      %v413 = vunpack.c.l.bf16 %v405
      %v414 = vunpack.c.h.bf16 %v405
      %v415 = vunpack.c.l.bf16 %v406
      %v416 = vunpack.c.h.bf16 %v406
      %v417 = vunpack.c.l.bf16 %v407
      %v418 = vunpack.c.h.bf16 %v407
      %v419 = vunpack.c.l.bf16 %v408
      %v420 = vunpack.c.h.bf16 %v408
      %v421 = vunpack.c.l.bf16 %v409
      %v422 = vunpack.c.h.bf16 %v409
      %v423 = vunpack.c.l.bf16 %v410
      %v424 = vunpack.c.h.bf16 %v410
      %v425 = vunpack.c.l.bf16 %v411
      %v426 = vunpack.c.h.bf16 %v411
      %v427 = vunpack.c.l.bf16 %v412
      %v428 = vunpack.c.h.bf16 %v412
      %v429 = vsub.f32 %v389, %v413
      %v430 = vsub.f32 %v390, %v414
      %v431 = vsub.f32 %v391, %v415
      %v432 = vsub.f32 %v392, %v416
      %v433 = vsub.f32 %v393, %v417
      %v434 = vsub.f32 %v394, %v418
      %v435 = vsub.f32 %v395, %v419
      %v436 = vsub.f32 %v396, %v420
      %v437 = vsub.f32 %v397, %v421
      %v438 = vsub.f32 %v398, %v422
      %v439 = vsub.f32 %v399, %v423
      %v440 = vsub.f32 %v400, %v424
      %v441 = vsub.f32 %v401, %v425
      %v442 = vsub.f32 %v402, %v426
      %v443 = vsub.f32 %v403, %v427
      %v444 = vsub.f32 %v404, %v428
      %v445 = vadd.f32 %v389, %v413
      %v446 = vadd.f32 %v390, %v414
      %v447 = vadd.f32 %v391, %v415
      %v448 = vadd.f32 %v392, %v416
      %v449 = vadd.f32 %v393, %v417
      %v450 = vadd.f32 %v394, %v418
      %v451 = vadd.f32 %v395, %v419
      %v452 = vadd.f32 %v396, %v420
      %v453 = vadd.f32 %v397, %v421
      %v454 = vadd.f32 %v398, %v422
      %v455 = vadd.f32 %v399, %v423
      %v456 = vadd.f32 %v400, %v424
      %v457 = vadd.f32 %v401, %v425
      %v458 = vadd.f32 %v402, %v426
      %v459 = vadd.f32 %v403, %v427
      %v460 = vadd.f32 %v404, %v428
      %v461 = vadd.f32 %v445, %v446
      %462 = vadd.xlane.f32.xlu0 %v461
      %v463 = vpop.xlane.xlu0 %462
      %v464 = vadd.f32 %v447, %v448
      %465 = vadd.xlane.f32.xlu0 %v464
      %v466 = vpop.xlane.xlu0 %465
      %v467 = vadd.f32 %v449, %v450
      %468 = vadd.xlane.f32.xlu0 %v467
      %v469 = vpop.xlane.xlu0 %468
      %v470 = vadd.f32 %v451, %v452
      %471 = vadd.xlane.f32.xlu0 %v470
      %v472 = vpop.xlane.xlu0 %471
      %v473 = vadd.f32 %v453, %v454
      %474 = vadd.xlane.f32.xlu0 %v473
      %v475 = vpop.xlane.xlu0 %474
      %v476 = vadd.f32 %v455, %v456
      %477 = vadd.xlane.f32.xlu0 %v476
      %v478 = vpop.xlane.xlu0 %477
      %v479 = vadd.f32 %v457, %v458
      %480 = vadd.xlane.f32.xlu0 %v479
      %v481 = vpop.xlane.xlu0 %480
      %v482 = vadd.f32 %v459, %v460
      %483 = vadd.xlane.f32.xlu0 %v482
      %v484 = vpop.xlane.xlu0 %483
      %v485 = vrcp.pop 256.0
      %v486 = vmul.f32 %v463, %v485
      %v487 = vmul.f32 %v466, %v485
      %v488 = vmul.f32 %v469, %v485
      %v489 = vmul.f32 %v472, %v485
      %v490 = vmul.f32 %v475, %v485
      %v491 = vmul.f32 %v478, %v485
      %v492 = vmul.f32 %v481, %v485
      %v493 = vmul.f32 %v484, %v485
      %v494 = vpack.c.bf16 %v447, %v445
      %v495 = vpack.c.bf16 %v448, %v446
      %v496 = vpack.c.bf16 %v451, %v449
      %v497 = vpack.c.bf16 %v452, %v450
      %v498 = vpack.c.bf16 %v455, %v453
      %v499 = vpack.c.bf16 %v456, %v454
      %v500 = vpack.c.bf16 %v459, %v457
      %v501 = vpack.c.bf16 %v460, %v458
      %v502 = vld [vmem:[%s2] sm:$0xf]
      %v503 = vld [vmem:[%s2 + $0x4] sm:$0xf]
      %v504 = vld [vmem:[%s8] sm:$0xff]
      %v505 = vld [vmem:[%s8 + $0x8] sm:$0xff]
      %507 = vset.pattern.permute.xlu0 0
      %508 = vperm.xlu0 %507, %v504
      %v509 = vpop.permute.xlu0 %508
      %512 = vset.pattern.permute.xlu0 0
      %513 = vperm.xlu0 %512, %v505
      %v514 = vpop.permute.xlu0 %513
      %v518 = vunpack.c.l.b16 %v502
      %v519 = vunpack.c.l.b16 %v503
      %v520 = vpack.c.b16 %v519, %v518
      %vm521 = vcmask 523264
      %v523 = vsel %vm521, %v520, 0
      %525 = vmatprep.subr.bf16.mxu0 %v495
      %526 = vmatpush1.bf16.msra.mxu0 %v494
      %527 = vmatprep.subr.bf16.mxu0 %v497
      %528 = vmatpush1.bf16.msra.mxu0 %v496
      %529 = vmatprep.subr.bf16.mxu0 %v499
      %530 = vmatpush1.bf16.msra.mxu0 %v498
      %531 = vmatprep.subr.bf16.mxu0 %v501
      %532 = vmatpush1.bf16.msra.mxu0 %v500
      %533 = vmatprep.subr.bf16.mxu0 0
      %534 = vmatpush1.bf16.msra.mxu0 0
      %535 = vmatprep.subr.bf16.mxu0 0
      %536 = vmatpush1.bf16.msra.mxu0 0
      %537 = vmatprep.subr.bf16.mxu0 0
      %538 = vmatpush1.bf16.msra.mxu0 0
      %539 = vmatprep.subr.bf16.mxu0 0
      %540 = vmatpush1.bf16.msra.mxu0 0
      %541 = vmatprep.subr.bf16.mxu0 0
      %542 = vmatpush1.bf16.msra.mxu0 0
      %543 = vmatprep.subr.bf16.mxu0 0
      %544 = vmatpush1.bf16.msra.mxu0 0
      %545 = vmatprep.subr.bf16.mxu0 0
      %546 = vmatpush1.bf16.msra.mxu0 0
      %547 = vmatprep.subr.bf16.mxu0 0
      %548 = vmatpush1.bf16.msra.mxu0 0
      %549 = vmatprep.subr.bf16.mxu0 0
      %550 = vmatpush1.bf16.msra.mxu0 0
      %551 = vmatprep.subr.bf16.mxu0 0
      %552 = vmatpush1.bf16.msra.mxu0 0
      %553 = vmatprep.subr.bf16.mxu0 0
      %554 = vmatpush1.bf16.msra.mxu0 0
      %555 = vmatprep.subr.bf16.mxu0 0
      %556 = vmatpush1.bf16.msra.mxu0 0
      %557 = vmatprep.mubr.bf16.mxu0 0
      %558 = vmatmul.mubr.bf16.gmra.mrb[0].mxu0 %v523
      %v559 = vpop.f32.mrb[0].mxu0
      %v560 = vadd.f32 %v509, %v559
      %v561 = vpop.f32.mrb[0].mxu0
      %v562 = vadd.f32 %v509, %v561
      %v563 = vpop.f32.mrb[0].mxu0
      %v564 = vadd.f32 %v514, %v563
      %v565 = vpop.f32.mrb[0].mxu0
      %v566 = vadd.f32 %v514, %v565
      %567 = vdwg.mxu0
      %v568 = vmax.f32 %v560, 0.0
      %v569 = vmax.f32 %v562, 0.0
      %v570 = vmax.f32 %v564, 0.0
      %v571 = vmax.f32 %v566, 0.0
      %v572 = vld [vmem:[%s3] sm:$0xf]
      %v573 = vld [vmem:[%s3 + $0x4] sm:$0xf]
      %v574 = vld [vmem:[%s3 + $0x8] sm:$0xf]
      %v575 = vld [vmem:[%s3 + $0xc] sm:$0xf]
      %v576 = vld [vmem:[%s3 + $0x10] sm:$0xf]
      %v577 = vld [vmem:[%s3 + $0x14] sm:$0xf]
      %v578 = vld [vmem:[%s3 + $0x18] sm:$0xf]
      %v579 = vld [vmem:[%s3 + $0x1c] sm:$0xf]
      %v580 = vpack.c.bf16 %v570, %v568
      %v581 = vpack.c.bf16 %v571, %v569
      %v582 = vld [vmem:[%s9] sm:$0xff]
      %v583 = vld [vmem:[%s9 + $0x8] sm:$0xff]
      %v584 = vld [vmem:[%s9 + $0x10] sm:$0xff]
      %v585 = vld [vmem:[%s9 + $0x18] sm:$0xff]
      %v586 = vld [vmem:[%s9 + $0x20] sm:$0xff]
      %v587 = vld [vmem:[%s9 + $0x28] sm:$0xff]
      %v588 = vld [vmem:[%s9 + $0x30] sm:$0xff]
      %v589 = vld [vmem:[%s9 + $0x38] sm:$0xff]
      %591 = vset.pattern.permute.xlu0 0
      %592 = vperm.xlu0 %591, %v582
      %v593 = vpop.permute.xlu0 %592
      %596 = vset.pattern.permute.xlu0 0
      %597 = vperm.xlu0 %596, %v583
      %v598 = vpop.permute.xlu0 %597
      %601 = vset.pattern.permute.xlu0 0
      %602 = vperm.xlu0 %601, %v584
      %v603 = vpop.permute.xlu0 %602
      %606 = vset.pattern.permute.xlu0 0
      %607 = vperm.xlu0 %606, %v585
      %v608 = vpop.permute.xlu0 %607
      %611 = vset.pattern.permute.xlu0 0
      %612 = vperm.xlu0 %611, %v586
      %v613 = vpop.permute.xlu0 %612
      %616 = vset.pattern.permute.xlu0 0
      %617 = vperm.xlu0 %616, %v587
      %v618 = vpop.permute.xlu0 %617
      %621 = vset.pattern.permute.xlu0 0
      %622 = vperm.xlu0 %621, %v588
      %v623 = vpop.permute.xlu0 %622
      %626 = vset.pattern.permute.xlu0 0
      %627 = vperm.xlu0 %626, %v589
      %v628 = vpop.permute.xlu0 %627
      %v638 = vunpack.c.l.b16 %v572
      %v639 = vunpack.c.l.b16 %v573
      %v640 = vunpack.c.l.b16 %v574
      %v641 = vunpack.c.l.b16 %v575
      %v642 = vunpack.c.l.b16 %v576
      %v643 = vunpack.c.l.b16 %v577
      %v644 = vunpack.c.l.b16 %v578
      %v645 = vunpack.c.l.b16 %v579
      %v646 = vpack.c.b16 %v639, %v638
      %v647 = vpack.c.b16 %v641, %v640
      %v648 = vpack.c.b16 %v643, %v642
      %v649 = vpack.c.b16 %v645, %v644
      %vm650 = vcmask 130048
      %v652 = vsel %vm650, %v646, 0
      %v655 = vsel %vm650, %v647, 0
      %v658 = vsel %vm650, %v648, 0
      %v661 = vsel %vm650, %v649, 0
      %663 = vmatprep.subr.bf16.mxu0 %v581
      %664 = vmatpush1.bf16.msra.mxu0 %v580
      %665 = vmatprep.subr.bf16.mxu0 0
      %666 = vmatpush1.bf16.msra.mxu0 0
      %667 = vmatprep.subr.bf16.mxu0 0
      %668 = vmatpush1.bf16.msra.mxu0 0
      %669 = vmatprep.subr.bf16.mxu0 0
      %670 = vmatpush1.bf16.msra.mxu0 0
      %671 = vmatprep.subr.bf16.mxu0 0
      %672 = vmatpush1.bf16.msra.mxu0 0
      %673 = vmatprep.subr.bf16.mxu0 0
      %674 = vmatpush1.bf16.msra.mxu0 0
      %675 = vmatprep.subr.bf16.mxu0 0
      %676 = vmatpush1.bf16.msra.mxu0 0
      %677 = vmatprep.subr.bf16.mxu0 0
      %678 = vmatpush1.bf16.msra.mxu0 0
      %679 = vmatprep.subr.bf16.mxu0 0
      %680 = vmatpush1.bf16.msra.mxu0 0
      %681 = vmatprep.subr.bf16.mxu0 0
      %682 = vmatpush1.bf16.msra.mxu0 0
      %683 = vmatprep.subr.bf16.mxu0 0
      %684 = vmatpush1.bf16.msra.mxu0 0
      %685 = vmatprep.subr.bf16.mxu0 0
      %686 = vmatpush1.bf16.msra.mxu0 0
      %687 = vmatprep.subr.bf16.mxu0 0
      %688 = vmatpush1.bf16.msra.mxu0 0
      %689 = vmatprep.subr.bf16.mxu0 0
      %690 = vmatpush1.bf16.msra.mxu0 0
      %691 = vmatprep.subr.bf16.mxu0 0
      %692 = vmatpush1.bf16.msra.mxu0 0
      %693 = vmatprep.subr.bf16.mxu0 0
      %694 = vmatpush1.bf16.msra.mxu0 0
      %695 = vmatprep.mubr.bf16.mxu0 0
      %696 = vmatmul.mubr.bf16.gmra.mrb[0].mxu0 %v652
      %v697 = vpop.f32.mrb[0].mxu0
      %v698 = vadd.f32 %v593, %v697
      %v699 = vpop.f32.mrb[0].mxu0
      %v700 = vadd.f32 %v593, %v699
      %v701 = vpop.f32.mrb[0].mxu0
      %v702 = vadd.f32 %v598, %v701
      %v703 = vpop.f32.mrb[0].mxu0
      %v704 = vadd.f32 %v598, %v703
      %705 = vmatprep.mubr.bf16.mxu0 0
      %706 = vmatmul.mubr.bf16.gmra.mrb[0].mxu0 %v655
      %v707 = vpop.f32.mrb[0].mxu0
      %v708 = vadd.f32 %v603, %v707
      %v709 = vpop.f32.mrb[0].mxu0
      %v710 = vadd.f32 %v603, %v709
      %v711 = vpop.f32.mrb[0].mxu0
      %v712 = vadd.f32 %v608, %v711
      %v713 = vpop.f32.mrb[0].mxu0
      %v714 = vadd.f32 %v608, %v713
      %715 = vmatprep.mubr.bf16.mxu0 0
      %716 = vmatmul.mubr.bf16.gmra.mrb[0].mxu0 %v658
      %v717 = vpop.f32.mrb[0].mxu0
      %v718 = vadd.f32 %v613, %v717
      %v719 = vpop.f32.mrb[0].mxu0
      %v720 = vadd.f32 %v613, %v719
      %v721 = vpop.f32.mrb[0].mxu0
      %v722 = vadd.f32 %v618, %v721
      %v723 = vpop.f32.mrb[0].mxu0
      %v724 = vadd.f32 %v618, %v723
      %725 = vmatprep.mubr.bf16.mxu0 0
      %726 = vmatmul.mubr.bf16.gmra.mrb[0].mxu0 %v661
      %v727 = vpop.f32.mrb[0].mxu0
      %v728 = vadd.f32 %v623, %v727
      %v729 = vpop.f32.mrb[0].mxu0
      %v730 = vadd.f32 %v623, %v729
      %v731 = vpop.f32.mrb[0].mxu0
      %v732 = vadd.f32 %v628, %v731
      %v733 = vpop.f32.mrb[0].mxu0
      %v734 = vadd.f32 %v628, %v733
      %735 = vdwg.mxu0
      %v736 = vpack.c.bf16 %v487, %v486
      %v737 = vpack.c.bf16 %v489, %v488
      %v738 = vpack.c.bf16 %v491, %v490
      %v739 = vpack.c.bf16 %v493, %v492
      %v740 = vld [vmem:[%s4] sm:$0xf]
      %v741 = vld [vmem:[%s4 + $0x4] sm:$0xf]
      %v744 = vunpack.c.l.b16 %v740
      %v745 = vunpack.c.l.b16 %v741
      %v746 = vpack.c.b16 %v745, %v744
      %747 = vrot.lane.b32.xlu0 %v504, 127
      %v748 = vpop.permute.xlu0 %747
      %749 = vrot.lane.b32.xlu0 %v505, 127
      %v750 = vpop.permute.xlu0 %749
      %v754 = vsel %vm521, %v746, 0
      %756 = vmatprep.subr.bf16.mxu0 0
      %757 = vmatpush1.bf16.msra.mxu0 %v736
      %758 = vmatprep.subr.bf16.mxu0 0
      %759 = vmatpush1.bf16.msra.mxu0 %v737
      %760 = vmatprep.subr.bf16.mxu0 0
      %761 = vmatpush1.bf16.msra.mxu0 %v738
      %762 = vmatprep.subr.bf16.mxu0 0
      %763 = vmatpush1.bf16.msra.mxu0 %v739
      %764 = vmatprep.subr.bf16.mxu0 0
      %765 = vmatpush1.bf16.msra.mxu0 0
      %766 = vmatprep.subr.bf16.mxu0 0
      %767 = vmatpush1.bf16.msra.mxu0 0
      %768 = vmatprep.subr.bf16.mxu0 0
      %769 = vmatpush1.bf16.msra.mxu0 0
      %770 = vmatprep.subr.bf16.mxu0 0
      %771 = vmatpush1.bf16.msra.mxu0 0
      %772 = vmatprep.subr.bf16.mxu0 0
      %773 = vmatpush1.bf16.msra.mxu0 0
      %774 = vmatprep.subr.bf16.mxu0 0
      %775 = vmatpush1.bf16.msra.mxu0 0
      %776 = vmatprep.subr.bf16.mxu0 0
      %777 = vmatpush1.bf16.msra.mxu0 0
      %778 = vmatprep.subr.bf16.mxu0 0
      %779 = vmatpush1.bf16.msra.mxu0 0
      %780 = vmatprep.subr.bf16.mxu0 0
      %781 = vmatpush1.bf16.msra.mxu0 0
      %782 = vmatprep.subr.bf16.mxu0 0
      %783 = vmatpush1.bf16.msra.mxu0 0
      %784 = vmatprep.subr.bf16.mxu0 0
      %785 = vmatpush1.bf16.msra.mxu0 0
      %786 = vmatprep.subr.bf16.mxu0 0
      %787 = vmatpush1.bf16.msra.mxu0 0
      %788 = vmatprep.mubr.bf16.mxu0 0
      %789 = vmatmul.mubr.bf16.gmra.mrb[0].mxu0 %v754
      %v790 = vpop.f32.mrb[0].mxu0
      %v791 = vadd.f32 %v748, %v790
      %v792 = vpop.f32.mrb[0].mxu0
      %v793 = vpop.f32.mrb[0].mxu0
      %v794 = vadd.f32 %v750, %v793
      %v795 = vpop.f32.mrb[0].mxu0
      %796 = vdwg.mxu0
      %v797 = vmax.f32 %v791, 0.0
      %v798 = vmax.f32 %v794, 0.0
      %v799 = vld [vmem:[%s5] sm:$0xf]
      %v800 = vld [vmem:[%s5 + $0x4] sm:$0xf]
      %v801 = vld [vmem:[%s5 + $0x8] sm:$0xf]
      %v802 = vld [vmem:[%s5 + $0xc] sm:$0xf]
      %v803 = vld [vmem:[%s5 + $0x10] sm:$0xf]
      %v804 = vld [vmem:[%s5 + $0x14] sm:$0xf]
      %v805 = vld [vmem:[%s5 + $0x18] sm:$0xf]
      %v806 = vld [vmem:[%s5 + $0x1c] sm:$0xf]
      %v807 = vpack.c.bf16 %v798, %v797
      %v816 = vunpack.c.l.b16 %v799
      %v817 = vunpack.c.l.b16 %v800
      %v818 = vunpack.c.l.b16 %v801
      %v819 = vunpack.c.l.b16 %v802
      %v820 = vunpack.c.l.b16 %v803
      %v821 = vunpack.c.l.b16 %v804
      %v822 = vunpack.c.l.b16 %v805
      %v823 = vunpack.c.l.b16 %v806
      %v824 = vpack.c.b16 %v817, %v816
      %v825 = vpack.c.b16 %v819, %v818
      %v826 = vpack.c.b16 %v821, %v820
      %v827 = vpack.c.b16 %v823, %v822
      %828 = vrot.lane.b32.xlu0 %v582, 127
      %v829 = vpop.permute.xlu0 %828
      %830 = vrot.lane.b32.xlu0 %v583, 127
      %v831 = vpop.permute.xlu0 %830
      %832 = vrot.lane.b32.xlu0 %v584, 127
      %v833 = vpop.permute.xlu0 %832
      %834 = vrot.lane.b32.xlu0 %v585, 127
      %v835 = vpop.permute.xlu0 %834
      %836 = vrot.lane.b32.xlu0 %v586, 127
      %v837 = vpop.permute.xlu0 %836
      %838 = vrot.lane.b32.xlu0 %v587, 127
      %v839 = vpop.permute.xlu0 %838
      %840 = vrot.lane.b32.xlu0 %v588, 127
      %v841 = vpop.permute.xlu0 %840
      %842 = vrot.lane.b32.xlu0 %v589, 127
      %v843 = vpop.permute.xlu0 %842
      %v853 = vsel %vm650, %v824, 0
      %v856 = vsel %vm650, %v825, 0
      %v859 = vsel %vm650, %v826, 0
      %v862 = vsel %vm650, %v827, 0
      %864 = vmatprep.subr.bf16.mxu0 0
      %865 = vmatpush1.bf16.msra.mxu0 %v807
      %866 = vmatprep.subr.bf16.mxu0 0
      %867 = vmatpush1.bf16.msra.mxu0 0
      %868 = vmatprep.subr.bf16.mxu0 0
      %869 = vmatpush1.bf16.msra.mxu0 0
      %870 = vmatprep.subr.bf16.mxu0 0
      %871 = vmatpush1.bf16.msra.mxu0 0
      %872 = vmatprep.subr.bf16.mxu0 0
      %873 = vmatpush1.bf16.msra.mxu0 0
      %874 = vmatprep.subr.bf16.mxu0 0
      %875 = vmatpush1.bf16.msra.mxu0 0
      %876 = vmatprep.subr.bf16.mxu0 0
      %877 = vmatpush1.bf16.msra.mxu0 0
      %878 = vmatprep.subr.bf16.mxu0 0
      %879 = vmatpush1.bf16.msra.mxu0 0
      %880 = vmatprep.subr.bf16.mxu0 0
      %881 = vmatpush1.bf16.msra.mxu0 0
      %882 = vmatprep.subr.bf16.mxu0 0
      %883 = vmatpush1.bf16.msra.mxu0 0
      %884 = vmatprep.subr.bf16.mxu0 0
      %885 = vmatpush1.bf16.msra.mxu0 0
      %886 = vmatprep.subr.bf16.mxu0 0
      %887 = vmatpush1.bf16.msra.mxu0 0
      %888 = vmatprep.subr.bf16.mxu0 0
      %889 = vmatpush1.bf16.msra.mxu0 0
      %890 = vmatprep.subr.bf16.mxu0 0
      %891 = vmatpush1.bf16.msra.mxu0 0
      %892 = vmatprep.subr.bf16.mxu0 0
      %893 = vmatpush1.bf16.msra.mxu0 0
      %894 = vmatprep.subr.bf16.mxu0 0
      %895 = vmatpush1.bf16.msra.mxu0 0
      %896 = vmatprep.mubr.bf16.mxu0 0
      %897 = vmatmul.mubr.bf16.gmra.mrb[0].mxu0 %v853
      %v898 = vpop.f32.mrb[0].mxu0
      %v899 = vadd.f32 %v829, %v898
      %v900 = vpop.f32.mrb[0].mxu0
      %v901 = vpop.f32.mrb[0].mxu0
      %v902 = vadd.f32 %v831, %v901
      %v903 = vpop.f32.mrb[0].mxu0
      %904 = vmatprep.mubr.bf16.mxu0 0
      %905 = vmatmul.mubr.bf16.gmra.mrb[0].mxu0 %v856
      %v906 = vpop.f32.mrb[0].mxu0
      %v907 = vadd.f32 %v833, %v906
      %v908 = vpop.f32.mrb[0].mxu0
      %v909 = vpop.f32.mrb[0].mxu0
      %v910 = vadd.f32 %v835, %v909
      %v911 = vpop.f32.mrb[0].mxu0
      %912 = vmatprep.mubr.bf16.mxu0 0
      %913 = vmatmul.mubr.bf16.gmra.mrb[0].mxu0 %v859
      %v914 = vpop.f32.mrb[0].mxu0
      %v915 = vadd.f32 %v837, %v914
      %v916 = vpop.f32.mrb[0].mxu0
      %v917 = vpop.f32.mrb[0].mxu0
      %v918 = vadd.f32 %v839, %v917
      %v919 = vpop.f32.mrb[0].mxu0
      %920 = vmatprep.mubr.bf16.mxu0 0
      %921 = vmatmul.mubr.bf16.gmra.mrb[0].mxu0 %v862
      %v922 = vpop.f32.mrb[0].mxu0
      %v923 = vadd.f32 %v841, %v922
      %v924 = vpop.f32.mrb[0].mxu0
      %v925 = vpop.f32.mrb[0].mxu0
      %v926 = vadd.f32 %v843, %v925
      %v927 = vpop.f32.mrb[0].mxu0
      %928 = vdwg.mxu0
      %930 = vset.pattern.permute.xlu0 0
      %931 = vperm.xlu0 %930, %v899
      %v932 = vpop.permute.xlu0 %931
      %935 = vset.pattern.permute.xlu0 0
      %936 = vperm.xlu0 %935, %v902
      %v937 = vpop.permute.xlu0 %936
      %940 = vset.pattern.permute.xlu0 0
      %941 = vperm.xlu0 %940, %v907
      %v942 = vpop.permute.xlu0 %941
      %945 = vset.pattern.permute.xlu0 0
      %946 = vperm.xlu0 %945, %v910
      %v947 = vpop.permute.xlu0 %946
      %950 = vset.pattern.permute.xlu0 0
      %951 = vperm.xlu0 %950, %v915
      %v952 = vpop.permute.xlu0 %951
      %955 = vset.pattern.permute.xlu0 0
      %956 = vperm.xlu0 %955, %v918
      %v957 = vpop.permute.xlu0 %956
      %960 = vset.pattern.permute.xlu0 0
      %961 = vperm.xlu0 %960, %v923
      %v962 = vpop.permute.xlu0 %961
      %965 = vset.pattern.permute.xlu0 0
      %966 = vperm.xlu0 %965, %v926
      %v967 = vpop.permute.xlu0 %966
      %v969 = vadd.f32 %v698, %v932
      %v970 = vadd.f32 %v700, %v932
      %v971 = vadd.f32 %v702, %v937
      %v972 = vadd.f32 %v704, %v937
      %v973 = vadd.f32 %v708, %v942
      %v974 = vadd.f32 %v710, %v942
      %v975 = vadd.f32 %v712, %v947
      %v976 = vadd.f32 %v714, %v947
      %v977 = vadd.f32 %v718, %v952
      %v978 = vadd.f32 %v720, %v952
      %v979 = vadd.f32 %v722, %v957
      %v980 = vadd.f32 %v724, %v957
      %v981 = vadd.f32 %v728, %v962
      %v982 = vadd.f32 %v730, %v962
      %v983 = vadd.f32 %v732, %v967
      %v984 = vadd.f32 %v734, %v967
      %v985 = vxor.u32 %v969, 2147483648
      %v986 = vxor.u32 %v970, 2147483648
      %v987 = vxor.u32 %v971, 2147483648
      %v988 = vxor.u32 %v972, 2147483648
      %v989 = vxor.u32 %v973, 2147483648
      %v990 = vxor.u32 %v974, 2147483648
      %v991 = vxor.u32 %v975, 2147483648
      %v992 = vxor.u32 %v976, 2147483648
      %v993 = vxor.u32 %v977, 2147483648
      %v994 = vxor.u32 %v978, 2147483648
      %v995 = vxor.u32 %v979, 2147483648
      %v996 = vxor.u32 %v980, 2147483648
      %v997 = vxor.u32 %v981, 2147483648
      %v998 = vxor.u32 %v982, 2147483648
      %v999 = vxor.u32 %v983, 2147483648
      %v1000 = vxor.u32 %v984, 2147483648
      %v1001 = vmul.f32 %v985, 1.442695
      %v1002 = vpow.pop %v1001
      %v1003 = vmul.f32 %v986, 1.442695
      %v1004 = vpow.pop %v1003
      %v1005 = vmul.f32 %v987, 1.442695
      %v1006 = vpow.pop %v1005
      %v1007 = vmul.f32 %v988, 1.442695
      %v1008 = vpow.pop %v1007
      %v1009 = vmul.f32 %v989, 1.442695
      %v1010 = vpow.pop %v1009
      %v1011 = vmul.f32 %v990, 1.442695
      %v1012 = vpow.pop %v1011
      %v1013 = vmul.f32 %v991, 1.442695
      %v1014 = vpow.pop %v1013
      %v1015 = vmul.f32 %v992, 1.442695
      %v1016 = vpow.pop %v1015
      %v1017 = vmul.f32 %v993, 1.442695
      %v1018 = vpow.pop %v1017
      %v1019 = vmul.f32 %v994, 1.442695
      %v1020 = vpow.pop %v1019
      %v1021 = vmul.f32 %v995, 1.442695
      %v1022 = vpow.pop %v1021
      %v1023 = vmul.f32 %v996, 1.442695
      %v1024 = vpow.pop %v1023
      %v1025 = vmul.f32 %v997, 1.442695
      %v1026 = vpow.pop %v1025
      %v1027 = vmul.f32 %v998, 1.442695
      %v1028 = vpow.pop %v1027
      %v1029 = vmul.f32 %v999, 1.442695
      %v1030 = vpow.pop %v1029
      %v1031 = vmul.f32 %v1000, 1.442695
      %v1032 = vpow.pop %v1031
      %v1033 = vadd.f32 %v1002, 1.0
      %v1034 = vadd.f32 %v1004, 1.0
      %v1035 = vadd.f32 %v1006, 1.0
      %v1036 = vadd.f32 %v1008, 1.0
      %v1037 = vadd.f32 %v1010, 1.0
      %v1038 = vadd.f32 %v1012, 1.0
      %v1039 = vadd.f32 %v1014, 1.0
      %v1040 = vadd.f32 %v1016, 1.0
      %v1041 = vadd.f32 %v1018, 1.0
      %v1042 = vadd.f32 %v1020, 1.0
      %v1043 = vadd.f32 %v1022, 1.0
      %v1044 = vadd.f32 %v1024, 1.0
      %v1045 = vadd.f32 %v1026, 1.0
      %v1046 = vadd.f32 %v1028, 1.0
      %v1047 = vadd.f32 %v1030, 1.0
      %v1048 = vadd.f32 %v1032, 1.0
      %v1049 = vrcp.pop %v1033
      %v1050 = vmul.f32 1.0, %v1049
      %v1051 = vrcp.pop %v1034
      %v1052 = vmul.f32 1.0, %v1051
      %v1053 = vrcp.pop %v1035
      %v1054 = vmul.f32 1.0, %v1053
      %v1055 = vrcp.pop %v1036
      %v1056 = vmul.f32 1.0, %v1055
      %v1057 = vrcp.pop %v1037
      %v1058 = vmul.f32 1.0, %v1057
      %v1059 = vrcp.pop %v1038
      %v1060 = vmul.f32 1.0, %v1059
      %v1061 = vrcp.pop %v1039
      %v1062 = vmul.f32 1.0, %v1061
      %v1063 = vrcp.pop %v1040
      %v1064 = vmul.f32 1.0, %v1063
      %v1065 = vrcp.pop %v1041
      %v1066 = vmul.f32 1.0, %v1065
      %v1067 = vrcp.pop %v1042
      %v1068 = vmul.f32 1.0, %v1067
      %v1069 = vrcp.pop %v1043
      %v1070 = vmul.f32 1.0, %v1069
      %v1071 = vrcp.pop %v1044
      %v1072 = vmul.f32 1.0, %v1071
      %v1073 = vrcp.pop %v1045
      %v1074 = vmul.f32 1.0, %v1073
      %v1075 = vrcp.pop %v1046
      %v1076 = vmul.f32 1.0, %v1075
      %v1077 = vrcp.pop %v1047
      %v1078 = vmul.f32 1.0, %v1077
      %v1079 = vrcp.pop %v1048
      %v1080 = vmul.f32 1.0, %v1079
      %v1081 = vmul.f32 %v429, %v1050
      %v1082 = vmul.f32 %v430, %v1052
      %v1083 = vmul.f32 %v431, %v1054
      %v1084 = vmul.f32 %v432, %v1056
      %v1085 = vmul.f32 %v433, %v1058
      %v1086 = vmul.f32 %v434, %v1060
      %v1087 = vmul.f32 %v435, %v1062
      %v1088 = vmul.f32 %v436, %v1064
      %v1089 = vmul.f32 %v437, %v1066
      %v1090 = vmul.f32 %v438, %v1068
      %v1091 = vmul.f32 %v439, %v1070
      %v1092 = vmul.f32 %v440, %v1072
      %v1093 = vmul.f32 %v441, %v1074
      %v1094 = vmul.f32 %v442, %v1076
      %v1095 = vmul.f32 %v443, %v1078
      %v1096 = vmul.f32 %v444, %v1080
      %v1097 = vadd.f32 %v413, %v1081
      %v1098 = vadd.f32 %v414, %v1082
      %v1099 = vadd.f32 %v415, %v1083
      %v1100 = vadd.f32 %v416, %v1084
      %v1101 = vadd.f32 %v417, %v1085
      %v1102 = vadd.f32 %v418, %v1086
      %v1103 = vadd.f32 %v419, %v1087
      %v1104 = vadd.f32 %v420, %v1088
      %v1105 = vadd.f32 %v421, %v1089
      %v1106 = vadd.f32 %v422, %v1090
      %v1107 = vadd.f32 %v423, %v1091
      %v1108 = vadd.f32 %v424, %v1092
      %v1109 = vadd.f32 %v425, %v1093
      %v1110 = vadd.f32 %v426, %v1094
      %v1111 = vadd.f32 %v427, %v1095
      %v1112 = vadd.f32 %v428, %v1096
      %v1113 = vadd.f32 %v1097, %v1098
      %1114 = vadd.xlane.f32.xlu0 %v1113
      %v1115 = vpop.xlane.xlu0 %1114
      %v1116 = vadd.f32 %v1099, %v1100
      %1117 = vadd.xlane.f32.xlu0 %v1116
      %v1118 = vpop.xlane.xlu0 %1117
      %v1119 = vadd.f32 %v1101, %v1102
      %1120 = vadd.xlane.f32.xlu0 %v1119
      %v1121 = vpop.xlane.xlu0 %1120
      %v1122 = vadd.f32 %v1103, %v1104
      %1123 = vadd.xlane.f32.xlu0 %v1122
      %v1124 = vpop.xlane.xlu0 %1123
      %v1125 = vadd.f32 %v1105, %v1106
      %1126 = vadd.xlane.f32.xlu0 %v1125
      %v1127 = vpop.xlane.xlu0 %1126
      %v1128 = vadd.f32 %v1107, %v1108
      %1129 = vadd.xlane.f32.xlu0 %v1128
      %v1130 = vpop.xlane.xlu0 %1129
      %v1131 = vadd.f32 %v1109, %v1110
      %1132 = vadd.xlane.f32.xlu0 %v1131
      %v1133 = vpop.xlane.xlu0 %1132
      %v1134 = vadd.f32 %v1111, %v1112
      %1135 = vadd.xlane.f32.xlu0 %v1134
      %v1136 = vpop.xlane.xlu0 %1135
      %v1137 = vmul.f32 %v1115, %v485
      %v1138 = vmul.f32 %v1118, %v485
      %v1139 = vmul.f32 %v1121, %v485
      %v1140 = vmul.f32 %v1124, %v485
      %v1141 = vmul.f32 %v1127, %v485
      %v1142 = vmul.f32 %v1130, %v485
      %v1143 = vmul.f32 %v1133, %v485
      %v1144 = vmul.f32 %v1136, %v485
      %v1145 = vpack.c.bf16 %v1099, %v1097
      %v1146 = vpack.c.bf16 %v1100, %v1098
      %v1147 = vpack.c.bf16 %v1103, %v1101
      %v1148 = vpack.c.bf16 %v1104, %v1102
      %v1149 = vpack.c.bf16 %v1107, %v1105
      %v1150 = vpack.c.bf16 %v1108, %v1106
      %v1151 = vpack.c.bf16 %v1111, %v1109
      %v1152 = vpack.c.bf16 %v1112, %v1110
      %v1153 = vld [vmem:[%s6] sm:$0xf]
      %v1154 = vld [vmem:[%s6 + $0x4] sm:$0xf]
      %1155 = vset.pattern.permute.xlu0 2
      %1156 = vperm.xlu0 %1155, %v504
      %v1157 = vpop.permute.xlu0 %1156
      %1159 = vset.pattern.permute.xlu0 2
      %1160 = vperm.xlu0 %1159, %v505
      %v1161 = vpop.permute.xlu0 %1160
      %v1165 = vunpack.c.l.b16 %v1153
      %v1166 = vunpack.c.l.b16 %v1154
      %v1167 = vpack.c.b16 %v1166, %v1165
      %v1169 = vsel %vm521, %v1167, 0
      %1171 = vmatprep.subr.bf16.mxu0 %v1146
      %1172 = vmatpush1.bf16.msra.mxu0 %v1145
      %1173 = vmatprep.subr.bf16.mxu0 %v1148
      %1174 = vmatpush1.bf16.msra.mxu0 %v1147
      %1175 = vmatprep.subr.bf16.mxu0 %v1150
      %1176 = vmatpush1.bf16.msra.mxu0 %v1149
      %1177 = vmatprep.subr.bf16.mxu0 %v1152
      %1178 = vmatpush1.bf16.msra.mxu0 %v1151
      %1179 = vmatprep.subr.bf16.mxu0 0
      %1180 = vmatpush1.bf16.msra.mxu0 0
      %1181 = vmatprep.subr.bf16.mxu0 0
      %1182 = vmatpush1.bf16.msra.mxu0 0
      %1183 = vmatprep.subr.bf16.mxu0 0
      %1184 = vmatpush1.bf16.msra.mxu0 0
      %1185 = vmatprep.subr.bf16.mxu0 0
      %1186 = vmatpush1.bf16.msra.mxu0 0
      %1187 = vmatprep.subr.bf16.mxu0 0
      %1188 = vmatpush1.bf16.msra.mxu0 0
      %1189 = vmatprep.subr.bf16.mxu0 0
      %1190 = vmatpush1.bf16.msra.mxu0 0
      %1191 = vmatprep.subr.bf16.mxu0 0
      %1192 = vmatpush1.bf16.msra.mxu0 0
      %1193 = vmatprep.subr.bf16.mxu0 0
      %1194 = vmatpush1.bf16.msra.mxu0 0
      %1195 = vmatprep.subr.bf16.mxu0 0
      %1196 = vmatpush1.bf16.msra.mxu0 0
      %1197 = vmatprep.subr.bf16.mxu0 0
      %1198 = vmatpush1.bf16.msra.mxu0 0
      %1199 = vmatprep.subr.bf16.mxu0 0
      %1200 = vmatpush1.bf16.msra.mxu0 0
      %1201 = vmatprep.subr.bf16.mxu0 0
      %1202 = vmatpush1.bf16.msra.mxu0 0
      %1203 = vmatprep.mubr.bf16.mxu0 0
      %1204 = vmatmul.mubr.bf16.gmra.mrb[0].mxu0 %v1169
      %v1205 = vpop.f32.mrb[0].mxu0
      %v1206 = vadd.f32 %v1157, %v1205
      %v1207 = vpop.f32.mrb[0].mxu0
      %v1208 = vadd.f32 %v1157, %v1207
      %v1209 = vpop.f32.mrb[0].mxu0
      %v1210 = vadd.f32 %v1161, %v1209
      %v1211 = vpop.f32.mrb[0].mxu0
      %v1212 = vadd.f32 %v1161, %v1211
      %1213 = vdwg.mxu0
      %v1214 = vmax.f32 %v1206, 0.0
      %v1215 = vmax.f32 %v1208, 0.0
      %v1216 = vmax.f32 %v1210, 0.0
      %v1217 = vmax.f32 %v1212, 0.0
      %v1218 = vld [vmem:[%s7] sm:$0xf]
      %v1219 = vld [vmem:[%s7 + $0x4] sm:$0xf]
      %v1220 = vld [vmem:[%s7 + $0x8] sm:$0xf]
      %v1221 = vld [vmem:[%s7 + $0xc] sm:$0xf]
      %v1222 = vld [vmem:[%s7 + $0x10] sm:$0xf]
      %v1223 = vld [vmem:[%s7 + $0x14] sm:$0xf]
      %v1224 = vld [vmem:[%s7 + $0x18] sm:$0xf]
      %v1225 = vld [vmem:[%s7 + $0x1c] sm:$0xf]
      %v1226 = vpack.c.bf16 %v1216, %v1214
      %v1227 = vpack.c.bf16 %v1217, %v1215
      %1228 = vset.pattern.permute.xlu0 2
      %1229 = vperm.xlu0 %1228, %v582
      %v1230 = vpop.permute.xlu0 %1229
      %1232 = vset.pattern.permute.xlu0 2
      %1233 = vperm.xlu0 %1232, %v583
      %v1234 = vpop.permute.xlu0 %1233
      %1236 = vset.pattern.permute.xlu0 2
      %1237 = vperm.xlu0 %1236, %v584
      %v1238 = vpop.permute.xlu0 %1237
      %1240 = vset.pattern.permute.xlu0 2
      %1241 = vperm.xlu0 %1240, %v585
      %v1242 = vpop.permute.xlu0 %1241
      %1244 = vset.pattern.permute.xlu0 2
      %1245 = vperm.xlu0 %1244, %v586
      %v1246 = vpop.permute.xlu0 %1245
      %1248 = vset.pattern.permute.xlu0 2
      %1249 = vperm.xlu0 %1248, %v587
      %v1250 = vpop.permute.xlu0 %1249
      %1252 = vset.pattern.permute.xlu0 2
      %1253 = vperm.xlu0 %1252, %v588
      %v1254 = vpop.permute.xlu0 %1253
      %1256 = vset.pattern.permute.xlu0 2
      %1257 = vperm.xlu0 %1256, %v589
      %v1258 = vpop.permute.xlu0 %1257
      %v1268 = vunpack.c.l.b16 %v1218
      %v1269 = vunpack.c.l.b16 %v1219
      %v1270 = vunpack.c.l.b16 %v1220
      %v1271 = vunpack.c.l.b16 %v1221
      %v1272 = vunpack.c.l.b16 %v1222
      %v1273 = vunpack.c.l.b16 %v1223
      %v1274 = vunpack.c.l.b16 %v1224
      %v1275 = vunpack.c.l.b16 %v1225
      %v1276 = vpack.c.b16 %v1269, %v1268
      %v1277 = vpack.c.b16 %v1271, %v1270
      %v1278 = vpack.c.b16 %v1273, %v1272
      %v1279 = vpack.c.b16 %v1275, %v1274
      %v1281 = vsel %vm650, %v1276, 0
      %v1284 = vsel %vm650, %v1277, 0
      %v1287 = vsel %vm650, %v1278, 0
      %v1290 = vsel %vm650, %v1279, 0
      %1292 = vmatprep.subr.bf16.mxu0 %v1227
      %1293 = vmatpush1.bf16.msra.mxu0 %v1226
      %1294 = vmatprep.subr.bf16.mxu0 0
      %1295 = vmatpush1.bf16.msra.mxu0 0
      %1296 = vmatprep.subr.bf16.mxu0 0
      %1297 = vmatpush1.bf16.msra.mxu0 0
      %1298 = vmatprep.subr.bf16.mxu0 0
      %1299 = vmatpush1.bf16.msra.mxu0 0
      %1300 = vmatprep.subr.bf16.mxu0 0
      %1301 = vmatpush1.bf16.msra.mxu0 0
      %1302 = vmatprep.subr.bf16.mxu0 0
      %1303 = vmatpush1.bf16.msra.mxu0 0
      %1304 = vmatprep.subr.bf16.mxu0 0
      %1305 = vmatpush1.bf16.msra.mxu0 0
      %1306 = vmatprep.subr.bf16.mxu0 0
      %1307 = vmatpush1.bf16.msra.mxu0 0
      %1308 = vmatprep.subr.bf16.mxu0 0
      %1309 = vmatpush1.bf16.msra.mxu0 0
      %1310 = vmatprep.subr.bf16.mxu0 0
      %1311 = vmatpush1.bf16.msra.mxu0 0
      %1312 = vmatprep.subr.bf16.mxu0 0
      %1313 = vmatpush1.bf16.msra.mxu0 0
      %1314 = vmatprep.subr.bf16.mxu0 0
      %1315 = vmatpush1.bf16.msra.mxu0 0
      %1316 = vmatprep.subr.bf16.mxu0 0
      %1317 = vmatpush1.bf16.msra.mxu0 0
      %1318 = vmatprep.subr.bf16.mxu0 0
      %1319 = vmatpush1.bf16.msra.mxu0 0
      %1320 = vmatprep.subr.bf16.mxu0 0
      %1321 = vmatpush1.bf16.msra.mxu0 0
      %1322 = vmatprep.subr.bf16.mxu0 0
      %1323 = vmatpush1.bf16.msra.mxu0 0
      %1324 = vmatprep.mubr.bf16.mxu0 0
      %1325 = vmatmul.mubr.bf16.gmra.mrb[0].mxu0 %v1281
      %v1326 = vpop.f32.mrb[0].mxu0
      %v1327 = vadd.f32 %v1230, %v1326
      %v1328 = vpop.f32.mrb[0].mxu0
      %v1329 = vadd.f32 %v1230, %v1328
      %v1330 = vpop.f32.mrb[0].mxu0
      %v1331 = vadd.f32 %v1234, %v1330
      %v1332 = vpop.f32.mrb[0].mxu0
      %v1333 = vadd.f32 %v1234, %v1332
      %1334 = vmatprep.mubr.bf16.mxu0 0
      %1335 = vmatmul.mubr.bf16.gmra.mrb[0].mxu0 %v1284
      %v1336 = vpop.f32.mrb[0].mxu0
      %v1337 = vadd.f32 %v1238, %v1336
      %v1338 = vpop.f32.mrb[0].mxu0
      %v1339 = vadd.f32 %v1238, %v1338
      %v1340 = vpop.f32.mrb[0].mxu0
      %v1341 = vadd.f32 %v1242, %v1340
      %v1342 = vpop.f32.mrb[0].mxu0
      %v1343 = vadd.f32 %v1242, %v1342
      %1344 = vmatprep.mubr.bf16.mxu0 0
      %1345 = vmatmul.mubr.bf16.gmra.mrb[0].mxu0 %v1287
      %v1346 = vpop.f32.mrb[0].mxu0
      %v1347 = vadd.f32 %v1246, %v1346
      %v1348 = vpop.f32.mrb[0].mxu0
      %v1349 = vadd.f32 %v1246, %v1348
      %v1350 = vpop.f32.mrb[0].mxu0
      %v1351 = vadd.f32 %v1250, %v1350
      %v1352 = vpop.f32.mrb[0].mxu0
      %v1353 = vadd.f32 %v1250, %v1352
      %1354 = vmatprep.mubr.bf16.mxu0 0
      %1355 = vmatmul.mubr.bf16.gmra.mrb[0].mxu0 %v1290
      %v1356 = vpop.f32.mrb[0].mxu0
      %v1357 = vadd.f32 %v1254, %v1356
      %v1358 = vpop.f32.mrb[0].mxu0
      %v1359 = vadd.f32 %v1254, %v1358
      %v1360 = vpop.f32.mrb[0].mxu0
      %v1361 = vadd.f32 %v1258, %v1360
      %v1362 = vpop.f32.mrb[0].mxu0
      %v1363 = vadd.f32 %v1258, %v1362
      %1364 = vdwg.mxu0
      %v1365 = vpack.c.bf16 %v1138, %v1137
      %v1366 = vpack.c.bf16 %v1140, %v1139
      %v1367 = vpack.c.bf16 %v1142, %v1141
      %v1368 = vpack.c.bf16 %v1144, %v1143
      %1369 = vmatprep.subr.bf16.mxu0 0
      %1370 = vmatpush1.bf16.msra.mxu0 %v1365
      %1371 = vmatprep.subr.bf16.mxu0 0
      %1372 = vmatpush1.bf16.msra.mxu0 %v1366
      %1373 = vmatprep.subr.bf16.mxu0 0
      %1374 = vmatpush1.bf16.msra.mxu0 %v1367
      %1375 = vmatprep.subr.bf16.mxu0 0
      %1376 = vmatpush1.bf16.msra.mxu0 %v1368
      %1377 = vmatprep.subr.bf16.mxu0 0
      %1378 = vmatpush1.bf16.msra.mxu0 0
      %1379 = vmatprep.subr.bf16.mxu0 0
      %1380 = vmatpush1.bf16.msra.mxu0 0
      %1381 = vmatprep.subr.bf16.mxu0 0
      %1382 = vmatpush1.bf16.msra.mxu0 0
      %1383 = vmatprep.subr.bf16.mxu0 0
      %1384 = vmatpush1.bf16.msra.mxu0 0
      %1385 = vmatprep.subr.bf16.mxu0 0
      %1386 = vmatpush1.bf16.msra.mxu0 0
      %1387 = vmatprep.subr.bf16.mxu0 0
      %1388 = vmatpush1.bf16.msra.mxu0 0
      %1389 = vmatprep.subr.bf16.mxu0 0
      %1390 = vmatpush1.bf16.msra.mxu0 0
      %1391 = vmatprep.subr.bf16.mxu0 0
      %1392 = vmatpush1.bf16.msra.mxu0 0
      %1393 = vmatprep.subr.bf16.mxu0 0
      %1394 = vmatpush1.bf16.msra.mxu0 0
      %1395 = vmatprep.subr.bf16.mxu0 0
      %1396 = vmatpush1.bf16.msra.mxu0 0
      %1397 = vmatprep.subr.bf16.mxu0 0
      %1398 = vmatpush1.bf16.msra.mxu0 0
      %1399 = vmatprep.subr.bf16.mxu0 0
      %1400 = vmatpush1.bf16.msra.mxu0 0
      %1401 = vmatprep.mubr.bf16.mxu0 0
      %1402 = vmatmul.mubr.bf16.gmra.mrb[0].mxu0 %v754
      %v1403 = vpop.f32.mrb[0].mxu0
      %v1404 = vadd.f32 %v748, %v1403
      %v1405 = vpop.f32.mrb[0].mxu0
      %v1406 = vpop.f32.mrb[0].mxu0
      %v1407 = vadd.f32 %v750, %v1406
      %v1408 = vpop.f32.mrb[0].mxu0
      %1409 = vdwg.mxu0
      %v1410 = vmax.f32 %v1404, 0.0
      %v1411 = vmax.f32 %v1407, 0.0
      %v1412 = vpack.c.bf16 %v1411, %v1410
      %1413 = vmatprep.subr.bf16.mxu0 0
      %1414 = vmatpush1.bf16.msra.mxu0 %v1412
      %1415 = vmatprep.subr.bf16.mxu0 0
      %1416 = vmatpush1.bf16.msra.mxu0 0
      %1417 = vmatprep.subr.bf16.mxu0 0
      %1418 = vmatpush1.bf16.msra.mxu0 0
      %1419 = vmatprep.subr.bf16.mxu0 0
      %1420 = vmatpush1.bf16.msra.mxu0 0
      %1421 = vmatprep.subr.bf16.mxu0 0
      %1422 = vmatpush1.bf16.msra.mxu0 0
      %1423 = vmatprep.subr.bf16.mxu0 0
      %1424 = vmatpush1.bf16.msra.mxu0 0
      %1425 = vmatprep.subr.bf16.mxu0 0
      %1426 = vmatpush1.bf16.msra.mxu0 0
      %1427 = vmatprep.subr.bf16.mxu0 0
      %1428 = vmatpush1.bf16.msra.mxu0 0
      %1429 = vmatprep.subr.bf16.mxu0 0
      %1430 = vmatpush1.bf16.msra.mxu0 0
      %1431 = vmatprep.subr.bf16.mxu0 0
      %1432 = vmatpush1.bf16.msra.mxu0 0
      %1433 = vmatprep.subr.bf16.mxu0 0
      %1434 = vmatpush1.bf16.msra.mxu0 0
      %1435 = vmatprep.subr.bf16.mxu0 0
      %1436 = vmatpush1.bf16.msra.mxu0 0
      %1437 = vmatprep.subr.bf16.mxu0 0
      %1438 = vmatpush1.bf16.msra.mxu0 0
      %1439 = vmatprep.subr.bf16.mxu0 0
      %1440 = vmatpush1.bf16.msra.mxu0 0
      %1441 = vmatprep.subr.bf16.mxu0 0
      %1442 = vmatpush1.bf16.msra.mxu0 0
      %1443 = vmatprep.subr.bf16.mxu0 0
      %1444 = vmatpush1.bf16.msra.mxu0 0
      %1445 = vmatprep.mubr.bf16.mxu0 0
      %1446 = vmatmul.mubr.bf16.gmra.mrb[0].mxu0 %v853
      %v1447 = vpop.f32.mrb[0].mxu0
      %v1448 = vadd.f32 %v829, %v1447
      %v1449 = vpop.f32.mrb[0].mxu0
      %v1450 = vpop.f32.mrb[0].mxu0
      %v1451 = vadd.f32 %v831, %v1450
      %v1452 = vpop.f32.mrb[0].mxu0
      %1453 = vmatprep.mubr.bf16.mxu0 0
      %1454 = vmatmul.mubr.bf16.gmra.mrb[0].mxu0 %v856
      %v1455 = vpop.f32.mrb[0].mxu0
      %v1456 = vadd.f32 %v833, %v1455
      %v1457 = vpop.f32.mrb[0].mxu0
      %v1458 = vpop.f32.mrb[0].mxu0
      %v1459 = vadd.f32 %v835, %v1458
      %v1460 = vpop.f32.mrb[0].mxu0
      %1461 = vmatprep.mubr.bf16.mxu0 0
      %1462 = vmatmul.mubr.bf16.gmra.mrb[0].mxu0 %v859
      %v1463 = vpop.f32.mrb[0].mxu0
      %v1464 = vadd.f32 %v837, %v1463
      %v1465 = vpop.f32.mrb[0].mxu0
      %v1466 = vpop.f32.mrb[0].mxu0
      %v1467 = vadd.f32 %v839, %v1466
      %v1468 = vpop.f32.mrb[0].mxu0
      %1469 = vmatprep.mubr.bf16.mxu0 0
      %1470 = vmatmul.mubr.bf16.gmra.mrb[0].mxu0 %v862
      %v1471 = vpop.f32.mrb[0].mxu0
      %v1472 = vadd.f32 %v841, %v1471
      %v1473 = vpop.f32.mrb[0].mxu0
      %v1474 = vpop.f32.mrb[0].mxu0
      %v1475 = vadd.f32 %v843, %v1474
      %v1476 = vpop.f32.mrb[0].mxu0
      %1477 = vdwg.mxu0
      %1479 = vset.pattern.permute.xlu0 0
      %1480 = vperm.xlu0 %1479, %v1448
      %v1481 = vpop.permute.xlu0 %1480
      %1484 = vset.pattern.permute.xlu0 0
      %1485 = vperm.xlu0 %1484, %v1451
      %v1486 = vpop.permute.xlu0 %1485
      %1489 = vset.pattern.permute.xlu0 0
      %1490 = vperm.xlu0 %1489, %v1456
      %v1491 = vpop.permute.xlu0 %1490
      %1494 = vset.pattern.permute.xlu0 0
      %1495 = vperm.xlu0 %1494, %v1459
      %v1496 = vpop.permute.xlu0 %1495
      %1499 = vset.pattern.permute.xlu0 0
      %1500 = vperm.xlu0 %1499, %v1464
      %v1501 = vpop.permute.xlu0 %1500
      %1504 = vset.pattern.permute.xlu0 0
      %1505 = vperm.xlu0 %1504, %v1467
      %v1506 = vpop.permute.xlu0 %1505
      %1509 = vset.pattern.permute.xlu0 0
      %1510 = vperm.xlu0 %1509, %v1472
      %v1511 = vpop.permute.xlu0 %1510
      %1514 = vset.pattern.permute.xlu0 0
      %1515 = vperm.xlu0 %1514, %v1475
      %v1516 = vpop.permute.xlu0 %1515
      %v1518 = vadd.f32 %v1327, %v1481
      %v1519 = vadd.f32 %v1329, %v1481
      %v1520 = vadd.f32 %v1331, %v1486
      %v1521 = vadd.f32 %v1333, %v1486
      %v1522 = vadd.f32 %v1337, %v1491
      %v1523 = vadd.f32 %v1339, %v1491
      %v1524 = vadd.f32 %v1341, %v1496
      %v1525 = vadd.f32 %v1343, %v1496
      %v1526 = vadd.f32 %v1347, %v1501
      %v1527 = vadd.f32 %v1349, %v1501
      %v1528 = vadd.f32 %v1351, %v1506
      %v1529 = vadd.f32 %v1353, %v1506
      %v1530 = vadd.f32 %v1357, %v1511
      %v1531 = vadd.f32 %v1359, %v1511
      %v1532 = vadd.f32 %v1361, %v1516
      %v1533 = vadd.f32 %v1363, %v1516
      %v1534 = vxor.u32 %v1518, 2147483648
      %v1535 = vxor.u32 %v1519, 2147483648
      %v1536 = vxor.u32 %v1520, 2147483648
      %v1537 = vxor.u32 %v1521, 2147483648
      %v1538 = vxor.u32 %v1522, 2147483648
      %v1539 = vxor.u32 %v1523, 2147483648
      %v1540 = vxor.u32 %v1524, 2147483648
      %v1541 = vxor.u32 %v1525, 2147483648
      %v1542 = vxor.u32 %v1526, 2147483648
      %v1543 = vxor.u32 %v1527, 2147483648
      %v1544 = vxor.u32 %v1528, 2147483648
      %v1545 = vxor.u32 %v1529, 2147483648
      %v1546 = vxor.u32 %v1530, 2147483648
      %v1547 = vxor.u32 %v1531, 2147483648
      %v1548 = vxor.u32 %v1532, 2147483648
      %v1549 = vxor.u32 %v1533, 2147483648
      %v1550 = vmul.f32 %v1534, 1.442695
      %v1551 = vpow.pop %v1550
      %v1552 = vmul.f32 %v1535, 1.442695
      %v1553 = vpow.pop %v1552
      %v1554 = vmul.f32 %v1536, 1.442695
      %v1555 = vpow.pop %v1554
      %v1556 = vmul.f32 %v1537, 1.442695
      %v1557 = vpow.pop %v1556
      %v1558 = vmul.f32 %v1538, 1.442695
      %v1559 = vpow.pop %v1558
      %v1560 = vmul.f32 %v1539, 1.442695
      %v1561 = vpow.pop %v1560
      %v1562 = vmul.f32 %v1540, 1.442695
      %v1563 = vpow.pop %v1562
      %v1564 = vmul.f32 %v1541, 1.442695
      %v1565 = vpow.pop %v1564
      %v1566 = vmul.f32 %v1542, 1.442695
      %v1567 = vpow.pop %v1566
      %v1568 = vmul.f32 %v1543, 1.442695
      %v1569 = vpow.pop %v1568
      %v1570 = vmul.f32 %v1544, 1.442695
      %v1571 = vpow.pop %v1570
      %v1572 = vmul.f32 %v1545, 1.442695
      %v1573 = vpow.pop %v1572
      %v1574 = vmul.f32 %v1546, 1.442695
      %v1575 = vpow.pop %v1574
      %v1576 = vmul.f32 %v1547, 1.442695
      %v1577 = vpow.pop %v1576
      %v1578 = vmul.f32 %v1548, 1.442695
      %v1579 = vpow.pop %v1578
      %v1580 = vmul.f32 %v1549, 1.442695
      %v1581 = vpow.pop %v1580
      %v1582 = vadd.f32 %v1551, 1.0
      %v1583 = vadd.f32 %v1553, 1.0
      %v1584 = vadd.f32 %v1555, 1.0
      %v1585 = vadd.f32 %v1557, 1.0
      %v1586 = vadd.f32 %v1559, 1.0
      %v1587 = vadd.f32 %v1561, 1.0
      %v1588 = vadd.f32 %v1563, 1.0
      %v1589 = vadd.f32 %v1565, 1.0
      %v1590 = vadd.f32 %v1567, 1.0
      %v1591 = vadd.f32 %v1569, 1.0
      %v1592 = vadd.f32 %v1571, 1.0
      %v1593 = vadd.f32 %v1573, 1.0
      %v1594 = vadd.f32 %v1575, 1.0
      %v1595 = vadd.f32 %v1577, 1.0
      %v1596 = vadd.f32 %v1579, 1.0
      %v1597 = vadd.f32 %v1581, 1.0
      %v1598 = vrcp.pop %v1582
      %v1599 = vmul.f32 1.0, %v1598
      %v1600 = vrcp.pop %v1583
      %v1601 = vmul.f32 1.0, %v1600
      %v1602 = vrcp.pop %v1584
      %v1603 = vmul.f32 1.0, %v1602
      %v1604 = vrcp.pop %v1585
      %v1605 = vmul.f32 1.0, %v1604
      %v1606 = vrcp.pop %v1586
      %v1607 = vmul.f32 1.0, %v1606
      %v1608 = vrcp.pop %v1587
      %v1609 = vmul.f32 1.0, %v1608
      %v1610 = vrcp.pop %v1588
      %v1611 = vmul.f32 1.0, %v1610
      %v1612 = vrcp.pop %v1589
      %v1613 = vmul.f32 1.0, %v1612
      %v1614 = vrcp.pop %v1590
      %v1615 = vmul.f32 1.0, %v1614
      %v1616 = vrcp.pop %v1591
      %v1617 = vmul.f32 1.0, %v1616
      %v1618 = vrcp.pop %v1592
      %v1619 = vmul.f32 1.0, %v1618
      %v1620 = vrcp.pop %v1593
      %v1621 = vmul.f32 1.0, %v1620
      %v1622 = vrcp.pop %v1594
      %v1623 = vmul.f32 1.0, %v1622
      %v1624 = vrcp.pop %v1595
      %v1625 = vmul.f32 1.0, %v1624
      %v1626 = vrcp.pop %v1596
      %v1627 = vmul.f32 1.0, %v1626
      %v1628 = vrcp.pop %v1597
      %v1629 = vmul.f32 1.0, %v1628
      %v1630 = vmul.f32 %v429, %v1599
      %v1631 = vmul.f32 %v430, %v1601
      %v1632 = vmul.f32 %v431, %v1603
      %v1633 = vmul.f32 %v432, %v1605
      %v1634 = vmul.f32 %v433, %v1607
      %v1635 = vmul.f32 %v434, %v1609
      %v1636 = vmul.f32 %v435, %v1611
      %v1637 = vmul.f32 %v436, %v1613
      %v1638 = vmul.f32 %v437, %v1615
      %v1639 = vmul.f32 %v438, %v1617
      %v1640 = vmul.f32 %v439, %v1619
      %v1641 = vmul.f32 %v440, %v1621
      %v1642 = vmul.f32 %v441, %v1623
      %v1643 = vmul.f32 %v442, %v1625
      %v1644 = vmul.f32 %v443, %v1627
      %v1645 = vmul.f32 %v444, %v1629
      %v1646 = vadd.f32 %v413, %v1630
      %v1647 = vadd.f32 %v414, %v1631
      %v1648 = vadd.f32 %v415, %v1632
      %v1649 = vadd.f32 %v416, %v1633
      %v1650 = vadd.f32 %v417, %v1634
      %v1651 = vadd.f32 %v418, %v1635
      %v1652 = vadd.f32 %v419, %v1636
      %v1653 = vadd.f32 %v420, %v1637
      %v1654 = vadd.f32 %v421, %v1638
      %v1655 = vadd.f32 %v422, %v1639
      %v1656 = vadd.f32 %v423, %v1640
      %v1657 = vadd.f32 %v424, %v1641
      %v1658 = vadd.f32 %v425, %v1642
      %v1659 = vadd.f32 %v426, %v1643
      %v1660 = vadd.f32 %v427, %v1644
      %v1661 = vadd.f32 %v428, %v1645
      %v1662 = vpack.c.bf16 %v1648, %v1646
      %v1663 = vpack.c.bf16 %v1649, %v1647
      %v1664 = vpack.c.bf16 %v1652, %v1650
      %v1665 = vpack.c.bf16 %v1653, %v1651
      %v1666 = vpack.c.bf16 %v1656, %v1654
      %v1667 = vpack.c.bf16 %v1657, %v1655
      %v1668 = vpack.c.bf16 %v1660, %v1658
      %v1669 = vpack.c.bf16 %v1661, %v1659
      %v1678 = vunpack.c.l.b16 %v1662
      %v1679 = vunpack.c.l.b16 %v1663
      %v1680 = vunpack.c.h.b16 %v1662
      %v1681 = vunpack.c.h.b16 %v1663
      %v1682 = vunpack.c.l.b16 %v1664
      %v1683 = vunpack.c.l.b16 %v1665
      %v1684 = vunpack.c.h.b16 %v1664
      %v1685 = vunpack.c.h.b16 %v1665
      %v1686 = vunpack.c.l.b16 %v1666
      %v1687 = vunpack.c.l.b16 %v1667
      %v1688 = vunpack.c.h.b16 %v1666
      %v1689 = vunpack.c.h.b16 %v1667
      %v1690 = vunpack.c.l.b16 %v1668
      %v1691 = vunpack.c.l.b16 %v1669
      %v1692 = vunpack.c.h.b16 %v1668
      %v1693 = vunpack.c.h.b16 %v1669
      %v1694 = vpack.c.b16 %v1679, %v1678
      %v1695 = vpack.c.b16 %v1681, %v1680
      %v1696 = vpack.c.b16 %v1683, %v1682
      %v1697 = vpack.c.b16 %v1685, %v1684
      %v1698 = vpack.c.b16 %v1687, %v1686
      %v1699 = vpack.c.b16 %v1689, %v1688
      %v1700 = vpack.c.b16 %v1691, %v1690
      %v1701 = vpack.c.b16 %v1693, %v1692
      %1710 = vst [vmem:[%s379] sm:$0xff] %v1694
      %1711 = vst [vmem:[%s379 + $0x8] sm:$0xff] %v1695
      %1712 = vst [vmem:[%s379 + $0x10] sm:$0xff] %v1696
      %1713 = vst [vmem:[%s379 + $0x18] sm:$0xff] %v1697
      %1714 = vst [vmem:[%s379 + $0x20] sm:$0xff] %v1698
      %1715 = vst [vmem:[%s379 + $0x28] sm:$0xff] %v1699
      %1716 = vst [vmem:[%s379 + $0x30] sm:$0xff] %v1700
      %1717 = vst [vmem:[%s379 + $0x38] sm:$0xff] %v1701
      %p1718 = scmp.lt.s32.totalorder %s21, 1
      %s1719 = scalar_select %p1718, %s21, 1
      %s1720 = smul.addr %s1719, 16
      %s1721 = smul.addr %s1720, 4
      %s1722 = scalar_lea.vmem %s10, %s1721
      // Predicated region
      $region61: #{gaf_forward.1} parent=59 // pred_check
        %p1723 = pneg %p259
      $region62: #{gaf_forward.1} parent=59 // pred_check_branch
        %1725 = sbr.rel (%p1723) target = $region64
      $region63: #{gaf_forward.1} parent=59 // pred_region
        _
      $region64: #{gaf_forward.1} parent=59 // pred_fallthru
        _
    $region60: #{gaf_forward.1} parent=5 // pred_fallthru
      _
    %p1726 = scmp.le.s32.totalorder 2, %s16
    // Predicated region
    $region65: #{gaf_forward.1} parent=5 // pred_check
      %p1727 = pneg %p1726
    $region66: #{gaf_forward.1} parent=5 // pred_check_branch
      %1729 = sbr.rel (%p1727) target = $region68
    $region67: #{gaf_forward.1} parent=5 // pred_region
      %s1730 = ssub.s32 %s16, 2
      // Predicated region
      $region69: #{gaf_forward.1} parent=67 // pred_check
        %p1731 = pneg %p265
      $region70: #{gaf_forward.1} parent=67 // pred_check_branch
        %1733 = sbr.rel (%p1731) target = $region72
      $region71: #{gaf_forward.1} parent=67 // pred_region
        %p1734 = scmp.lt.s32.totalorder %s22, 1
        %s1735 = scalar_select %p1734, %s22, 1
        %s1736 = smul.addr %s1735, 16
        %s1737 = smul.addr %s1736, 4
        %s1738 = scalar_lea.vmem %s10, %s1737
      $region72: #{gaf_forward.1} parent=67 // pred_fallthru
        _
    $region68: #{gaf_forward.1} parent=5 // pred_fallthru
      _
  $region6: #{gaf_forward.1} parent=0 // loop_footer
    %s20 = sadd.s32 1, %s16
  $region7: #{gaf_forward.1} parent=0 // loop_footer_branch
    %15 = sbr.rel target = $region3
  $region8: #{gaf_forward.1} parent=0 // loop_exit
    _

</llo_original>
